<compile_context>
chip_gen: v5e
topology: v5e:2x2
jax: 0.10.0
libtpu: 0.0.40
codegen_flags: <defaults>
</compile_context>

<pallas_src>
import functools

import jax
import jax.numpy as jnp
from jax.experimental import pallas as pl
from jax.experimental.pallas import tpu as pltpu


# ----------------------------------------------------------------------------
# Kernel: one lstm1-forward cell per grid step; whole tail at t == T-1.
# PyTorch gate order: i, f, g, o.
# ----------------------------------------------------------------------------
def _lstm_model_kernel(x_ref,                          # (1, bb, D) timestep block
                       w1fx_ref, w1fh_ref, b1f_ref,    # lstm1 fwd: (4,D,H),(4,H,H),(4,1,H)
                       w1bx_ref, b1b_ref,              # lstm1 bwd (i,g,o): (3,D,H),(3,1,H)
                       w2a_ref, w2b_ref, b2_ref,       # lstm2 K-split, i/g/o x 2 dirs: (6,H,H)x2,(6,1,H)
                       fcwa_ref, fcwb_ref, fcb_ref,    # fc K-split: (H,O),(H,O),(1,O)
                       o_ref,                          # (bb, O)
                       h_sc, c_sc):                    # (bb, H) f32 carried state
    t = pl.program_id(1)

    @pl.when(t == 0)
    def _():
        h_sc[...] = jnp.zeros_like(h_sc)
        c_sc[...] = jnp.zeros_like(c_sc)

    wdt = w1fx_ref.dtype

    def dotf(a, b):
        return jnp.dot(a, b, preferred_element_type=jnp.float32)

    x_t = x_ref[0].astype(wdt)          # (bb, D), cast once for the MXU
    hc = h_sc[...].astype(wdt)          # (bb, H) operand for the recurrent dots

    # ---- lstm1 forward-direction cell at step t (per-gate: no lane slicing) ----
    gi = dotf(x_t, w1fx_ref[0]) + dotf(hc, w1fh_ref[0]) + b1f_ref[0]
    gf = dotf(x_t, w1fx_ref[1]) + dotf(hc, w1fh_ref[1]) + b1f_ref[1]
    gg = dotf(x_t, w1fx_ref[2]) + dotf(hc, w1fh_ref[2]) + b1f_ref[2]
    go = dotf(x_t, w1fx_ref[3]) + dotf(hc, w1fh_ref[3]) + b1f_ref[3]
    c = jax.nn.sigmoid(gf) * c_sc[...] + jax.nn.sigmoid(gi) * jnp.tanh(gg)
    h_new = jax.nn.sigmoid(go) * jnp.tanh(c)
    c_sc[...] = c
    h_sc[...] = h_new

    # ---- last timestep: finish the whole model inside the same kernel ----
    @pl.when(t == pl.num_programs(1) - 1)
    def _():
        # lstm1 backward dir: out1[:, -1] is its FIRST step => zero-state cell on
        # x[:, -1, :] (this block).  With c0 = 0 the f gate is irrelevant.
        i1b = jax.nn.sigmoid(dotf(x_t, w1bx_ref[0]) + b1b_ref[0])
        g1b = jnp.tanh(dotf(x_t, w1bx_ref[1]) + b1b_ref[1])
        o1b = jax.nn.sigmoid(dotf(x_t, w1bx_ref[2]) + b1b_ref[2])
        h1_bwd = o1b * jnp.tanh(i1b * g1b)               # (bb, H) f32
        # dropout1: identity (eval mode).

        # lstm2 on the length-1 sequence [h1_fwd | h1_bwd]: one zero-state cell
        # per direction.  The 2H input stays K-split — no lane concatenation.
        hf = h_new.astype(wdt)
        hb = h1_bwd.astype(wdt)

        def zs_cell2(base):
            def gate(k):
                return (dotf(hf, w2a_ref[base + k]) + dotf(hb, w2b_ref[base + k])
                        + b2_ref[base + k])
            i = jax.nn.sigmoid(gate(0))
            g = jnp.tanh(gate(1))
            o = jax.nn.sigmoid(gate(2))
            return o * jnp.tanh(i * g)

        h2_fwd = zs_cell2(0)     # lstm2 forward direction
        h2_bwd = zs_cell2(3)     # lstm2 backward direction
        # dropout2: identity (eval mode).

        out = (dotf(h2_fwd.astype(wdt), fcwa_ref[...])
               + dotf(h2_bwd.astype(wdt), fcwb_ref[...]) + fcb_ref[...])
        o_ref[...] = out.astype(o_ref.dtype)


# ----------------------------------------------------------------------------
# pallas_call wrapper
# ----------------------------------------------------------------------------
def _fused_forward(x3, weights, *, batch_block):
    (w1fx, w1fh, b1f, w1bx, b1b, w2a, w2b, b2, fcwa, fcwb, fcb) = weights
    T, B, D = x3.shape
    H = w1fh.shape[-1]
    O = fcwa.shape[-1]
    bb = batch_block
    nb = B // bb

    def wspec(arr):
        nd = arr.ndim
        return pl.BlockSpec(arr.shape, lambda b, t: (0,) * nd)   # resident weights

    in_specs = ([pl.BlockSpec((1, bb, D), lambda b, t: (t, b, 0))]
                + [wspec(a) for a in weights])
    out_specs = pl.BlockSpec((bb, O), lambda b, t: (b, 0))

    # Scoped-VMEM budget: resident weights + double-buffered x step + state + out,
    # with 2x margin, never below the v5e default and never above v7x's 64 MiB.
    footprint = (sum(a.size * a.dtype.itemsize for a in weights)
                 + 4 * bb * D * 4 + 2 * bb * H * 4 + 2 * bb * O * 4)
    vmem_limit = int(min(64 * 2**20, max(16 * 2**20, 2 * footprint)))

    grid_spec = pltpu.PrefetchScalarGridSpec(
        num_scalar_prefetch=0,
        grid=(nb, T),
        in_specs=in_specs,
        out_specs=out_specs,
        scratch_shapes=[pltpu.VMEM((bb, H), jnp.float32),    # h carry
                        pltpu.VMEM((bb, H), jnp.float32)],   # c carry
    )
    return pl.pallas_call(
        _lstm_model_kernel,
        out_shape=jax.ShapeDtypeStruct((B, O), jnp.float32),
        grid_spec=grid_spec,
        compiler_params=pltpu.CompilerParams(
            dimension_semantics=("parallel", "arbitrary"),
            vmem_limit_bytes=vmem_limit),
    )(x3, *weights)


# ----------------------------------------------------------------------------
# Weight preparation: per-gate split, K-split for the 2H consumers, bf16 cast.
# ----------------------------------------------------------------------------
def _split_cols(w, H, gate_idx):
    """w: (..., 4H) with columns [i|f|g|o] -> (len(gate_idx), ..., H)."""
    return jnp.stack([w[..., k * H:(k + 1) * H] for k in gate_idx], axis=0)


def _prepare_weights(params, weight_dtype):
    w1f_x, w1f_h, b1f = params["l1_f"]          # (D,4H), (H,4H), (1,4H)
    w1b_x, _w1b_h, b1b = params["l1_b"]         # h0=0 -> W_hh unused for out[:, -1]
    w2f_x, _w2f_h, b2f = params["l2_f"]         # length-1 seq, h0=0 -> W_hh unused
    w2b_x, _w2b_h, b2b = params["l2_b"]
    fc_w, fc_b = params["fc_w"], params["fc_b"]
    H = w1f_h.shape[0]

    IFGO, IGO = (0, 1, 2, 3), (0, 2, 3)
    wd = weight_dtype
    w1fx = _split_cols(w1f_x, H, IFGO).astype(wd)              # (4, D, H)
    w1fh = _split_cols(w1f_h, H, IFGO).astype(wd)              # (4, H, H)
    b1f_s = _split_cols(b1f, H, IFGO)                          # (4, 1, H) f32
    w1bx = _split_cols(w1b_x, H, IGO).astype(wd)               # (3, D, H)
    b1b_s = _split_cols(b1b, H, IGO)                           # (3, 1, H)

    # lstm2: rows [:H] multiply h1_fwd, rows [H:] multiply h1_bwd (K-split);
    # gate-split columns (i, g, o); both directions stacked -> (6, H, H).
    w2a = jnp.concatenate([_split_cols(w2f_x[:H], H, IGO),
                           _split_cols(w2b_x[:H], H, IGO)], axis=0).astype(wd)
    w2b_ = jnp.concatenate([_split_cols(w2f_x[H:], H, IGO),
                            _split_cols(w2b_x[H:], H, IGO)], axis=0).astype(wd)
    b2 = jnp.concatenate([_split_cols(b2f, H, IGO),
                          _split_cols(b2b, H, IGO)], axis=0)   # (6, 1, H)

    fcwa = fc_w[:H].astype(wd)                                 # (H, O)
    fcwb = fc_w[H:].astype(wd)                                 # (H, O)
    return (w1fx, w1fh, b1f_s, w1bx, b1b_s, w2a, w2b_, b2, fcwa, fcwb, fc_b)


@functools.partial(jax.jit, static_argnames=("weight_dtype",))
def lstm_model_forward(params, x, weight_dtype=jnp.bfloat16):
    """x: (B, T, D) batch-first, like the PyTorch module.  Returns (B, O) f32."""
    B, T, D = x.shape
    x3 = jnp.transpose(x, (1, 0, 2))              # (T, B, D): per-step (B,D) blocks
    weights = _prepare_weights(params, weight_dtype)
    # v7x has 2 TensorCores: split the batch into 2 'parallel' blocks whenever the
    # per-block sublane count stays a multiple of 8.
    bb = B // 2 if (B % 16 == 0) else B
    return _fused_forward(x3, weights, batch_block=bb)


# ----------------------------------------------------------------------------
# Parameter construction (deterministic, PyTorch-style uniform(-1/sqrt(H), 1/sqrt(H)))
# ----------------------------------------------------------------------------
def _init_lstm_dir(key, in_size, hidden):
    k = 1.0 / jnp.sqrt(hidden)
    k1, k2, k3, k4 = jax.random.split(key, 4)
    # stored transposed for x @ W form; bias = b_ih + b_hh folded together
    wih = jax.random.uniform(k1, (in_size, 4 * hidden), jnp.float32, -k, k)
    whh = jax.random.uniform(k2, (hidden, 4 * hidden), jnp.float32, -k, k)
    b_ih = jax.random.uniform(k3, (1, 4 * hidden), jnp.float32, -k, k)
    b_hh = jax.random.uniform(k4, (1, 4 * hidden), jnp.float32, -k, k)
    return wih, whh, b_ih + b_hh


def init_params(key, input_size, hidden_size, output_size):
    keys = jax.random.split(key, 6)
    p = {}
    p["l1_f"] = _init_lstm_dir(keys[0], input_size, hidden_size)
    p["l1_b"] = _init_lstm_dir(keys[1], input_size, hidden_size)
    p["l2_f"] = _init_lstm_dir(keys[2], 2 * hidden_size, hidden_size)
    p["l2_b"] = _init_lstm_dir(keys[3], 2 * hidden_size, hidden_size)
    kfc = 1.0 / jnp.sqrt(2 * hidden_size)
    p["fc_w"] = jax.random.uniform(keys[4], (2 * hidden_size, output_size),
                                   jnp.float32, -kfc, kfc)
    p["fc_b"] = jax.random.uniform(keys[5], (1, output_size),
                                   jnp.float32, -kfc, kfc)
    return p


# ----------------------------------------------------------------------------
# Pure-JAX reference (full bidirectional sequences, faithful to the PyTorch module)
# ----------------------------------------------------------------------------
def _ref_lstm_dir(x, wih, whh, b, reverse):
    B, T, D = x.shape
    H = whh.shape[0]
    h = jnp.zeros((B, H), jnp.float32)
    c = jnp.zeros((B, H), jnp.float32)
    ts = range(T - 1, -1, -1) if reverse else range(T)
    outs = [None] * T
    for t in ts:
        g = x[:, t, :] @ wih + h @ whh + b
        i = jax.nn.sigmoid(g[:, 0:H])
        f = jax.nn.sigmoid(g[:, H:2 * H])
        gg = jnp.tanh(g[:, 2 * H:3 * H])
        o = jax.nn.sigmoid(g[:, 3 * H:4 * H])
        c = f * c + i * gg
        h = o * jnp.tanh(c)
        outs[t] = h
    return jnp.stack(outs, axis=1)


def _ref_forward(params, x):
    o1 = jnp.concatenate([_ref_lstm_dir(x, *params["l1_f"], False),
                          _ref_lstm_dir(x, *params["l1_b"], True)], axis=-1)
    l1 = o1[:, -1, :][:, None, :]
    o2 = jnp.concatenate([_ref_lstm_dir(l1, *params["l2_f"], False),
                          _ref_lstm_dir(l1, *params["l2_b"], True)], axis=-1)
    return o2[:, -1, :] @ params["fc_w"] + params["fc_b"]


if __name__ == "__main__":
    BATCH, SEQ, INPUT, HIDDEN, OUTPUT = 2, 8, 4, 32, 1

    key = jax.random.PRNGKey(0)
    kx, kp = jax.random.split(key)
    x = jax.random.normal(kx, (BATCH, SEQ, INPUT), jnp.float32)
    params = init_params(kp, INPUT, HIDDEN, OUTPUT)

    y_ref = _ref_forward(params, x)

    # f32 weights: tight numerical check of the kernel structure.
    y32 = jax.block_until_ready(
        lstm_model_forward(params, x, weight_dtype=jnp.float32))
    assert y32.shape == (BATCH, OUTPUT), y32.shape
    assert jnp.allclose(y32, y_ref, atol=2e-3, rtol=2e-3), (y32, y_ref)

    # bf16 weights (default; recommended for v6e/v7x): looser tolerance for the
    # bf16 operand rounding; c/h state and gate accumulation stay f32.
    y16 = jax.block_until_ready(lstm_model_forward(params, x))
    assert y16.shape == (BATCH, OUTPUT), y16.shape
    assert jnp.allclose(y16, y_ref, atol=3e-2, rtol=3e-2), (y16, y_ref)

    print("KERNEL_OK")
</pallas_src>

<mosaic_0001>
module attributes {stable_mosaic.version = 11 : i64} {
  func.func @_lstm_model_kernel(%arg0: i32, %arg1: i32, %arg2: memref<1x2x4xf32, #tpu.memory_space<vmem>>, %arg3: memref<4x4x32xf32, #tpu.memory_space<vmem>>, %arg4: memref<4x32x32xf32, #tpu.memory_space<vmem>>, %arg5: memref<4x1x32xf32, #tpu.memory_space<vmem>>, %arg6: memref<3x4x32xf32, #tpu.memory_space<vmem>>, %arg7: memref<3x1x32xf32, #tpu.memory_space<vmem>>, %arg8: memref<6x32x32xf32, #tpu.memory_space<vmem>>, %arg9: memref<6x32x32xf32, #tpu.memory_space<vmem>>, %arg10: memref<6x1x32xf32, #tpu.memory_space<vmem>>, %arg11: memref<32x1xf32, #tpu.memory_space<vmem>>, %arg12: memref<32x1xf32, #tpu.memory_space<vmem>>, %arg13: memref<1x1xf32, #tpu.memory_space<vmem>>, %arg14: memref<2x1xf32, #tpu.memory_space<vmem>>, %arg15: memref<2x32xf32, #tpu.memory_space<vmem>>, %arg16: memref<2x32xf32, #tpu.memory_space<vmem>>) attributes {dimension_semantics = [#tpu.dimension_semantics<parallel>, #tpu.dimension_semantics<arbitrary>], iteration_bounds = array<i64: 1, 8>, scalar_prefetch = 0 : i64, scratch_operands = 2 : i64, tpu.core_type = #tpu.core_type<tc>, window_params = [{transform_indices = @transform_0, window_bounds = array<i64: 1, 2, 4>}, {pipeline_mode = #tpu.pipeline_mode<synchronous>, transform_indices = @transform_1, window_bounds = array<i64: 4, 4, 32>}, {pipeline_mode = #tpu.pipeline_mode<synchronous>, transform_indices = @transform_2, window_bounds = array<i64: 4, 32, 32>}, {pipeline_mode = #tpu.pipeline_mode<synchronous>, transform_indices = @transform_3, window_bounds = array<i64: 4, 1, 32>}, {pipeline_mode = #tpu.pipeline_mode<synchronous>, transform_indices = @transform_4, window_bounds = array<i64: 3, 4, 32>}, {pipeline_mode = #tpu.pipeline_mode<synchronous>, transform_indices = @transform_5, window_bounds = array<i64: 3, 1, 32>}, {pipeline_mode = #tpu.pipeline_mode<synchronous>, transform_indices = @transform_6, window_bounds = array<i64: 6, 32, 32>}, {pipeline_mode = #tpu.pipeline_mode<synchronous>, transform_indices = @transform_7, window_bounds = array<i64: 6, 32, 32>}, {pipeline_mode = #tpu.pipeline_mode<synchronous>, transform_indices = @transform_8, window_bounds = array<i64: 6, 1, 32>}, {pipeline_mode = #tpu.pipeline_mode<synchronous>, transform_indices = @transform_9, window_bounds = array<i64: 32, 1>}, {pipeline_mode = #tpu.pipeline_mode<synchronous>, transform_indices = @transform_10, window_bounds = array<i64: 32, 1>}, {pipeline_mode = #tpu.pipeline_mode<synchronous>, transform_indices = @transform_11, window_bounds = array<i64: 1, 1>}, {transform_indices = @transform_12, window_bounds = array<i64: 2, 1>}]} {
    %c0_i32 = arith.constant 0 : i32
    %0 = arith.cmpi eq, %arg1, %c0_i32 : i32
    %1 = arith.extui %0 : i1 to i32
    %c0_i32_0 = arith.constant 0 : i32
    %2 = arith.cmpi ne, %1, %c0_i32_0 : i32
    scf.if %2 {
      %cst_55 = arith.constant 0.000000e+00 : f32
      %77 = vector.broadcast %cst_55 : f32 to vector<2x32xf32>
      %c0_56 = arith.constant 0 : index
      %c0_57 = arith.constant 0 : index
      %78 = vector.load %arg15[%c0_56, %c0_57] : memref<2x32xf32, #tpu.memory_space<vmem>>, vector<2x32xf32>
      tpu.vector_store %arg15[%c0_56, %c0_57], %77 {strides = array<i32>} : memref<2x32xf32, #tpu.memory_space<vmem>>, vector<2x32xf32>,
      %cst_58 = arith.constant 0.000000e+00 : f32
      %79 = vector.broadcast %cst_58 : f32 to vector<2x32xf32>
      %c0_59 = arith.constant 0 : index
      %c0_60 = arith.constant 0 : index
      %80 = vector.load %arg16[%c0_59, %c0_60] : memref<2x32xf32, #tpu.memory_space<vmem>>, vector<2x32xf32>
      tpu.vector_store %arg16[%c0_59, %c0_60], %79 {strides = array<i32>} : memref<2x32xf32, #tpu.memory_space<vmem>>, vector<2x32xf32>,
    } else {
    }
    %c0 = arith.constant 0 : index
    %c0_1 = arith.constant 0 : index
    %c0_2 = arith.constant 0 : index
    %3 = vector.load %arg2[%c0, %c0_1, %c0_2] : memref<1x2x4xf32, #tpu.memory_space<vmem>>, vector<1x2x4xf32>
    %4 = vector.shape_cast %3 : vector<1x2x4xf32> to vector<2x4xf32>
    %c0_3 = arith.constant 0 : index
    %c0_4 = arith.constant 0 : index
    %5 = vector.load %arg15[%c0_3, %c0_4] : memref<2x32xf32, #tpu.memory_space<vmem>>, vector<2x32xf32>
    %c0_5 = arith.constant 0 : index
    %c0_6 = arith.constant 0 : index
    %c0_7 = arith.constant 0 : index
    %6 = vector.load %arg3[%c0_5, %c0_6, %c0_7] : memref<4x4x32xf32, #tpu.memory_space<vmem>>, vector<1x4x32xf32>
    %7 = vector.shape_cast %6 : vector<1x4x32xf32> to vector<4x32xf32>
    %cst = arith.constant dense<0.000000e+00> : vector<2x32xf32>
    %8 = tpu.matmul %4, %7, %cst {dimension_numbers = #tpu.dot_dimension_numbers<[1], [0], [0], [1], [0, 0, 1, 1], [], []>} : vector<2x4xf32>, vector<4x32xf32>, vector<2x32xf32> -> vector<2x32xf32>
    %c0_8 = arith.constant 0 : index
    %c0_9 = arith.constant 0 : index
    %c0_10 = arith.constant 0 : index
    %9 = vector.load %arg4[%c0_8, %c0_9, %c0_10] : memref<4x32x32xf32, #tpu.memory_space<vmem>>, vector<1x32x32xf32>
    %10 = vector.shape_cast %9 : vector<1x32x32xf32> to vector<32x32xf32>
    %cst_11 = arith.constant dense<0.000000e+00> : vector<2x32xf32>
    %11 = tpu.matmul %5, %10, %cst_11 {dimension_numbers = #tpu.dot_dimension_numbers<[1], [0], [0], [1], [0, 0, 1, 1], [], []>} : vector<2x32xf32>, vector<32x32xf32>, vector<2x32xf32> -> vector<2x32xf32>
    %12 = arith.addf %8, %11 : vector<2x32xf32>
    %c0_12 = arith.constant 0 : index
    %c0_13 = arith.constant 0 : index
    %c0_14 = arith.constant 0 : index
    %13 = vector.load %arg5[%c0_12, %c0_13, %c0_14] : memref<4x1x32xf32, #tpu.memory_space<vmem>>, vector<1x1x32xf32>
    %14 = vector.shape_cast %13 : vector<1x1x32xf32> to vector<1x32xf32>
    %15 = vector.broadcast %14 : vector<1x32xf32> to vector<2x32xf32>
    %16 = arith.addf %12, %15 : vector<2x32xf32>
    %c1 = arith.constant 1 : index
    %c0_15 = arith.constant 0 : index
    %c0_16 = arith.constant 0 : index
    %17 = vector.load %arg3[%c1, %c0_15, %c0_16] : memref<4x4x32xf32, #tpu.memory_space<vmem>>, vector<1x4x32xf32>
    %18 = vector.shape_cast %17 : vector<1x4x32xf32> to vector<4x32xf32>
    %cst_17 = arith.constant dense<0.000000e+00> : vector<2x32xf32>
    %19 = tpu.matmul %4, %18, %cst_17 {dimension_numbers = #tpu.dot_dimension_numbers<[1], [0], [0], [1], [0, 0, 1, 1], [], []>} : vector<2x4xf32>, vector<4x32xf32>, vector<2x32xf32> -> vector<2x32xf32>
    %c1_18 = arith.constant 1 : index
    %c0_19 = arith.constant 0 : index
    %c0_20 = arith.constant 0 : index
    %20 = vector.load %arg4[%c1_18, %c0_19, %c0_20] : memref<4x32x32xf32, #tpu.memory_space<vmem>>, vector<1x32x32xf32>
    %21 = vector.shape_cast %20 : vector<1x32x32xf32> to vector<32x32xf32>
    %cst_21 = arith.constant dense<0.000000e+00> : vector<2x32xf32>
    %22 = tpu.matmul %5, %21, %cst_21 {dimension_numbers = #tpu.dot_dimension_numbers<[1], [0], [0], [1], [0, 0, 1, 1], [], []>} : vector<2x32xf32>, vector<32x32xf32>, vector<2x32xf32> -> vector<2x32xf32>
    %23 = arith.addf %19, %22 : vector<2x32xf32>
    %c1_22 = arith.constant 1 : index
    %c0_23 = arith.constant 0 : index
    %c0_24 = arith.constant 0 : index
    %24 = vector.load %arg5[%c1_22, %c0_23, %c0_24] : memref<4x1x32xf32, #tpu.memory_space<vmem>>, vector<1x1x32xf32>
    %25 = vector.shape_cast %24 : vector<1x1x32xf32> to vector<1x32xf32>
    %26 = vector.broadcast %25 : vector<1x32xf32> to vector<2x32xf32>
    %27 = arith.addf %23, %26 : vector<2x32xf32>
    %c2 = arith.constant 2 : index
    %c0_25 = arith.constant 0 : index
    %c0_26 = arith.constant 0 : index
    %28 = vector.load %arg3[%c2, %c0_25, %c0_26] : memref<4x4x32xf32, #tpu.memory_space<vmem>>, vector<1x4x32xf32>
    %29 = vector.shape_cast %28 : vector<1x4x32xf32> to vector<4x32xf32>
    %cst_27 = arith.constant dense<0.000000e+00> : vector<2x32xf32>
    %30 = tpu.matmul %4, %29, %cst_27 {dimension_numbers = #tpu.dot_dimension_numbers<[1], [0], [0], [1], [0, 0, 1, 1], [], []>} : vector<2x4xf32>, vector<4x32xf32>, vector<2x32xf32> -> vector<2x32xf32>
    %c2_28 = arith.constant 2 : index
    %c0_29 = arith.constant 0 : index
    %c0_30 = arith.constant 0 : index
    %31 = vector.load %arg4[%c2_28, %c0_29, %c0_30] : memref<4x32x32xf32, #tpu.memory_space<vmem>>, vector<1x32x32xf32>
    %32 = vector.shape_cast %31 : vector<1x32x32xf32> to vector<32x32xf32>
    %cst_31 = arith.constant dense<0.000000e+00> : vector<2x32xf32>
    %33 = tpu.matmul %5, %32, %cst_31 {dimension_numbers = #tpu.dot_dimension_numbers<[1], [0], [0], [1], [0, 0, 1, 1], [], []>} : vector<2x32xf32>, vector<32x32xf32>, vector<2x32xf32> -> vector<2x32xf32>
    %34 = arith.addf %30, %33 : vector<2x32xf32>
    %c2_32 = arith.constant 2 : index
    %c0_33 = arith.constant 0 : index
    %c0_34 = arith.constant 0 : index
    %35 = vector.load %arg5[%c2_32, %c0_33, %c0_34] : memref<4x1x32xf32, #tpu.memory_space<vmem>>, vector<1x1x32xf32>
    %36 = vector.shape_cast %35 : vector<1x1x32xf32> to vector<1x32xf32>
    %37 = vector.broadcast %36 : vector<1x32xf32> to vector<2x32xf32>
    %38 = arith.addf %34, %37 : vector<2x32xf32>
    %c3 = arith.constant 3 : index
    %c0_35 = arith.constant 0 : index
    %c0_36 = arith.constant 0 : index
    %39 = vector.load %arg3[%c3, %c0_35, %c0_36] : memref<4x4x32xf32, #tpu.memory_space<vmem>>, vector<1x4x32xf32>
    %40 = vector.shape_cast %39 : vector<1x4x32xf32> to vector<4x32xf32>
    %cst_37 = arith.constant dense<0.000000e+00> : vector<2x32xf32>
    %41 = tpu.matmul %4, %40, %cst_37 {dimension_numbers = #tpu.dot_dimension_numbers<[1], [0], [0], [1], [0, 0, 1, 1], [], []>} : vector<2x4xf32>, vector<4x32xf32>, vector<2x32xf32> -> vector<2x32xf32>
    %c3_38 = arith.constant 3 : index
    %c0_39 = arith.constant 0 : index
    %c0_40 = arith.constant 0 : index
    %42 = vector.load %arg4[%c3_38, %c0_39, %c0_40] : memref<4x32x32xf32, #tpu.memory_space<vmem>>, vector<1x32x32xf32>
    %43 = vector.shape_cast %42 : vector<1x32x32xf32> to vector<32x32xf32>
    %cst_41 = arith.constant dense<0.000000e+00> : vector<2x32xf32>
    %44 = tpu.matmul %5, %43, %cst_41 {dimension_numbers = #tpu.dot_dimension_numbers<[1], [0], [0], [1], [0, 0, 1, 1], [], []>} : vector<2x32xf32>, vector<32x32xf32>, vector<2x32xf32> -> vector<2x32xf32>
    %45 = arith.addf %41, %44 : vector<2x32xf32>
    %c3_42 = arith.constant 3 : index
    %c0_43 = arith.constant 0 : index
    %c0_44 = arith.constant 0 : index
    %46 = vector.load %arg5[%c3_42, %c0_43, %c0_44] : memref<4x1x32xf32, #tpu.memory_space<vmem>>, vector<1x1x32xf32>
    %47 = vector.shape_cast %46 : vector<1x1x32xf32> to vector<1x32xf32>
    %48 = vector.broadcast %47 : vector<1x32xf32> to vector<2x32xf32>
    %49 = arith.addf %45, %48 : vector<2x32xf32>
    %50 = arith.negf %27 : vector<2x32xf32>
    %51 = math.exp %50 : vector<2x32xf32>
    %cst_45 = arith.constant 1.000000e+00 : f32
    %52 = vector.broadcast %cst_45 : f32 to vector<2x32xf32>
    %53 = arith.addf %52, %51 : vector<2x32xf32>
    %54 = arith.divf %52, %53 : vector<2x32xf32>
    %c0_46 = arith.constant 0 : index
    %c0_47 = arith.constant 0 : index
    %55 = vector.load %arg16[%c0_46, %c0_47] : memref<2x32xf32, #tpu.memory_space<vmem>>, vector<2x32xf32>
    %56 = arith.mulf %54, %55 : vector<2x32xf32>
    %57 = arith.negf %16 : vector<2x32xf32>
    %58 = math.exp %57 : vector<2x32xf32>
    %cst_48 = arith.constant 1.000000e+00 : f32
    %59 = vector.broadcast %cst_48 : f32 to vector<2x32xf32>
    %60 = arith.addf %59, %58 : vector<2x32xf32>
    %61 = arith.divf %59, %60 : vector<2x32xf32>
    %62 = math.tanh %38 : vector<2x32xf32>
    %63 = arith.mulf %61, %62 : vector<2x32xf32>
    %64 = arith.addf %56, %63 : vector<2x32xf32>
    %65 = arith.negf %49 : vector<2x32xf32>
    %66 = math.exp %65 : vector<2x32xf32>
    %cst_49 = arith.constant 1.000000e+00 : f32
    %67 = vector.broadcast %cst_49 : f32 to vector<2x32xf32>
    %68 = arith.addf %67, %66 : vector<2x32xf32>
    %69 = arith.divf %67, %68 : vector<2x32xf32>
    %70 = math.tanh %64 : vector<2x32xf32>
    %71 = arith.mulf %69, %70 : vector<2x32xf32>
    %c0_50 = arith.constant 0 : index
    %c0_51 = arith.constant 0 : index
    %72 = vector.load %arg16[%c0_50, %c0_51] : memref<2x32xf32, #tpu.memory_space<vmem>>, vector<2x32xf32>
    tpu.vector_store %arg16[%c0_50, %c0_51], %64 {strides = array<i32>} : memref<2x32xf32, #tpu.memory_space<vmem>>, vector<2x32xf32>,
    %c0_52 = arith.constant 0 : index
    %c0_53 = arith.constant 0 : index
    %73 = vector.load %arg15[%c0_52, %c0_53] : memref<2x32xf32, #tpu.memory_space<vmem>>, vector<2x32xf32>
    tpu.vector_store %arg15[%c0_52, %c0_53], %71 {strides = array<i32>} : memref<2x32xf32, #tpu.memory_space<vmem>>, vector<2x32xf32>,
    %c7_i32 = arith.constant 7 : i32
    %74 = arith.cmpi eq, %arg1, %c7_i32 : i32
    %75 = arith.extui %74 : i1 to i32
    %c0_i32_54 = arith.constant 0 : i32
    %76 = arith.cmpi ne, %75, %c0_i32_54 : i32
    scf.if %76 {
      %c0_55 = arith.constant 0 : index
      %c0_56 = arith.constant 0 : index
      %c0_57 = arith.constant 0 : index
      %77 = vector.load %arg6[%c0_55, %c0_56, %c0_57] : memref<3x4x32xf32, #tpu.memory_space<vmem>>, vector<1x4x32xf32>
      %78 = vector.shape_cast %77 : vector<1x4x32xf32> to vector<4x32xf32>
      %cst_58 = arith.constant dense<0.000000e+00> : vector<2x32xf32>
      %79 = tpu.matmul %4, %78, %cst_58 {dimension_numbers = #tpu.dot_dimension_numbers<[1], [0], [0], [1], [0, 0, 1, 1], [], []>} : vector<2x4xf32>, vector<4x32xf32>, vector<2x32xf32> -> vector<2x32xf32>
      %c0_59 = arith.constant 0 : index
      %c0_60 = arith.constant 0 : index
      %c0_61 = arith.constant 0 : index
      %80 = vector.load %arg7[%c0_59, %c0_60, %c0_61] : memref<3x1x32xf32, #tpu.memory_space<vmem>>, vector<1x1x32xf32>
      %81 = vector.shape_cast %80 : vector<1x1x32xf32> to vector<1x32xf32>
      %82 = vector.broadcast %81 : vector<1x32xf32> to vector<2x32xf32>
      %83 = arith.addf %79, %82 : vector<2x32xf32>
      %84 = arith.negf %83 : vector<2x32xf32>
      %85 = math.exp %84 : vector<2x32xf32>
      %cst_62 = arith.constant 1.000000e+00 : f32
      %86 = vector.broadcast %cst_62 : f32 to vector<2x32xf32>
      %87 = arith.addf %86, %85 : vector<2x32xf32>
      %88 = arith.divf %86, %87 : vector<2x32xf32>
      %c1_63 = arith.constant 1 : index
      %c0_64 = arith.constant 0 : index
      %c0_65 = arith.constant 0 : index
      %89 = vector.load %arg6[%c1_63, %c0_64, %c0_65] : memref<3x4x32xf32, #tpu.memory_space<vmem>>, vector<1x4x32xf32>
      %90 = vector.shape_cast %89 : vector<1x4x32xf32> to vector<4x32xf32>
      %cst_66 = arith.constant dense<0.000000e+00> : vector<2x32xf32>
      %91 = tpu.matmul %4, %90, %cst_66 {dimension_numbers = #tpu.dot_dimension_numbers<[1], [0], [0], [1], [0, 0, 1, 1], [], []>} : vector<2x4xf32>, vector<4x32xf32>, vector<2x32xf32> -> vector<2x32xf32>
      %c1_67 = arith.constant 1 : index
      %c0_68 = arith.constant 0 : index
      %c0_69 = arith.constant 0 : index
      %92 = vector.load %arg7[%c1_67, %c0_68, %c0_69] : memref<3x1x32xf32, #tpu.memory_space<vmem>>, vector<1x1x32xf32>
      %93 = vector.shape_cast %92 : vector<1x1x32xf32> to vector<1x32xf32>
      %94 = vector.broadcast %93 : vector<1x32xf32> to vector<2x32xf32>
      %95 = arith.addf %91, %94 : vector<2x32xf32>
      %96 = math.tanh %95 : vector<2x32xf32>
      %c2_70 = arith.constant 2 : index
      %c0_71 = arith.constant 0 : index
      %c0_72 = arith.constant 0 : index
      %97 = vector.load %arg6[%c2_70, %c0_71, %c0_72] : memref<3x4x32xf32, #tpu.memory_space<vmem>>, vector<1x4x32xf32>
      %98 = vector.shape_cast %97 : vector<1x4x32xf32> to vector<4x32xf32>
      %cst_73 = arith.constant dense<0.000000e+00> : vector<2x32xf32>
      %99 = tpu.matmul %4, %98, %cst_73 {dimension_numbers = #tpu.dot_dimension_numbers<[1], [0], [0], [1], [0, 0, 1, 1], [], []>} : vector<2x4xf32>, vector<4x32xf32>, vector<2x32xf32> -> vector<2x32xf32>
      %c2_74 = arith.constant 2 : index
      %c0_75 = arith.constant 0 : index
      %c0_76 = arith.constant 0 : index
      %100 = vector.load %arg7[%c2_74, %c0_75, %c0_76] : memref<3x1x32xf32, #tpu.memory_space<vmem>>, vector<1x1x32xf32>
      %101 = vector.shape_cast %100 : vector<1x1x32xf32> to vector<1x32xf32>
      %102 = vector.broadcast %101 : vector<1x32xf32> to vector<2x32xf32>
      %103 = arith.addf %99, %102 : vector<2x32xf32>
      %104 = arith.negf %103 : vector<2x32xf32>
      %105 = math.exp %104 : vector<2x32xf32>
      %cst_77 = arith.constant 1.000000e+00 : f32
      %106 = vector.broadcast %cst_77 : f32 to vector<2x32xf32>
      %107 = arith.addf %106, %105 : vector<2x32xf32>
      %108 = arith.divf %106, %107 : vector<2x32xf32>
      %109 = arith.mulf %88, %96 : vector<2x32xf32>
      %110 = math.tanh %109 : vector<2x32xf32>
      %111 = arith.mulf %108, %110 : vector<2x32xf32>
      %c0_78 = arith.constant 0 : index
      %c0_79 = arith.constant 0 : index
      %c0_80 = arith.constant 0 : index
      %112 = vector.load %arg8[%c0_78, %c0_79, %c0_80] : memref<6x32x32xf32, #tpu.memory_space<vmem>>, vector<1x32x32xf32>
      %113 = vector.shape_cast %112 : vector<1x32x32xf32> to vector<32x32xf32>
      %cst_81 = arith.constant dense<0.000000e+00> : vector<2x32xf32>
      %114 = tpu.matmul %71, %113, %cst_81 {dimension_numbers = #tpu.dot_dimension_numbers<[1], [0], [0], [1], [0, 0, 1, 1], [], []>} : vector<2x32xf32>, vector<32x32xf32>, vector<2x32xf32> -> vector<2x32xf32>
      %c0_82 = arith.constant 0 : index
      %c0_83 = arith.constant 0 : index
      %c0_84 = arith.constant 0 : index
      %115 = vector.load %arg9[%c0_82, %c0_83, %c0_84] : memref<6x32x32xf32, #tpu.memory_space<vmem>>, vector<1x32x32xf32>
      %116 = vector.shape_cast %115 : vector<1x32x32xf32> to vector<32x32xf32>
      %cst_85 = arith.constant dense<0.000000e+00> : vector<2x32xf32>
      %117 = tpu.matmul %111, %116, %cst_85 {dimension_numbers = #tpu.dot_dimension_numbers<[1], [0], [0], [1], [0, 0, 1, 1], [], []>} : vector<2x32xf32>, vector<32x32xf32>, vector<2x32xf32> -> vector<2x32xf32>
      %118 = arith.addf %114, %117 : vector<2x32xf32>
      %c0_86 = arith.constant 0 : index
      %c0_87 = arith.constant 0 : index
      %c0_88 = arith.constant 0 : index
      %119 = vector.load %arg10[%c0_86, %c0_87, %c0_88] : memref<6x1x32xf32, #tpu.memory_space<vmem>>, vector<1x1x32xf32>
      %120 = vector.shape_cast %119 : vector<1x1x32xf32> to vector<1x32xf32>
      %121 = vector.broadcast %120 : vector<1x32xf32> to vector<2x32xf32>
      %122 = arith.addf %118, %121 : vector<2x32xf32>
      %123 = arith.negf %122 : vector<2x32xf32>
      %124 = math.exp %123 : vector<2x32xf32>
      %cst_89 = arith.constant 1.000000e+00 : f32
      %125 = vector.broadcast %cst_89 : f32 to vector<2x32xf32>
      %126 = arith.addf %125, %124 : vector<2x32xf32>
      %127 = arith.divf %125, %126 : vector<2x32xf32>
      %c1_90 = arith.constant 1 : index
      %c0_91 = arith.constant 0 : index
      %c0_92 = arith.constant 0 : index
      %128 = vector.load %arg8[%c1_90, %c0_91, %c0_92] : memref<6x32x32xf32, #tpu.memory_space<vmem>>, vector<1x32x32xf32>
      %129 = vector.shape_cast %128 : vector<1x32x32xf32> to vector<32x32xf32>
      %cst_93 = arith.constant dense<0.000000e+00> : vector<2x32xf32>
      %130 = tpu.matmul %71, %129, %cst_93 {dimension_numbers = #tpu.dot_dimension_numbers<[1], [0], [0], [1], [0, 0, 1, 1], [], []>} : vector<2x32xf32>, vector<32x32xf32>, vector<2x32xf32> -> vector<2x32xf32>
      %c1_94 = arith.constant 1 : index
      %c0_95 = arith.constant 0 : index
      %c0_96 = arith.constant 0 : index
      %131 = vector.load %arg9[%c1_94, %c0_95, %c0_96] : memref<6x32x32xf32, #tpu.memory_space<vmem>>, vector<1x32x32xf32>
      %132 = vector.shape_cast %131 : vector<1x32x32xf32> to vector<32x32xf32>
      %cst_97 = arith.constant dense<0.000000e+00> : vector<2x32xf32>
      %133 = tpu.matmul %111, %132, %cst_97 {dimension_numbers = #tpu.dot_dimension_numbers<[1], [0], [0], [1], [0, 0, 1, 1], [], []>} : vector<2x32xf32>, vector<32x32xf32>, vector<2x32xf32> -> vector<2x32xf32>
      %134 = arith.addf %130, %133 : vector<2x32xf32>
      %c1_98 = arith.constant 1 : index
      %c0_99 = arith.constant 0 : index
      %c0_100 = arith.constant 0 : index
      %135 = vector.load %arg10[%c1_98, %c0_99, %c0_100] : memref<6x1x32xf32, #tpu.memory_space<vmem>>, vector<1x1x32xf32>
      %136 = vector.shape_cast %135 : vector<1x1x32xf32> to vector<1x32xf32>
      %137 = vector.broadcast %136 : vector<1x32xf32> to vector<2x32xf32>
      %138 = arith.addf %134, %137 : vector<2x32xf32>
      %139 = math.tanh %138 : vector<2x32xf32>
      %c2_101 = arith.constant 2 : index
      %c0_102 = arith.constant 0 : index
      %c0_103 = arith.constant 0 : index
      %140 = vector.load %arg8[%c2_101, %c0_102, %c0_103] : memref<6x32x32xf32, #tpu.memory_space<vmem>>, vector<1x32x32xf32>
      %141 = vector.shape_cast %140 : vector<1x32x32xf32> to vector<32x32xf32>
      %cst_104 = arith.constant dense<0.000000e+00> : vector<2x32xf32>
      %142 = tpu.matmul %71, %141, %cst_104 {dimension_numbers = #tpu.dot_dimension_numbers<[1], [0], [0], [1], [0, 0, 1, 1], [], []>} : vector<2x32xf32>, vector<32x32xf32>, vector<2x32xf32> -> vector<2x32xf32>
      %c2_105 = arith.constant 2 : index
      %c0_106 = arith.constant 0 : index
      %c0_107 = arith.constant 0 : index
      %143 = vector.load %arg9[%c2_105, %c0_106, %c0_107] : memref<6x32x32xf32, #tpu.memory_space<vmem>>, vector<1x32x32xf32>
      %144 = vector.shape_cast %143 : vector<1x32x32xf32> to vector<32x32xf32>
      %cst_108 = arith.constant dense<0.000000e+00> : vector<2x32xf32>
      %145 = tpu.matmul %111, %144, %cst_108 {dimension_numbers = #tpu.dot_dimension_numbers<[1], [0], [0], [1], [0, 0, 1, 1], [], []>} : vector<2x32xf32>, vector<32x32xf32>, vector<2x32xf32> -> vector<2x32xf32>
      %146 = arith.addf %142, %145 : vector<2x32xf32>
      %c2_109 = arith.constant 2 : index
      %c0_110 = arith.constant 0 : index
      %c0_111 = arith.constant 0 : index
      %147 = vector.load %arg10[%c2_109, %c0_110, %c0_111] : memref<6x1x32xf32, #tpu.memory_space<vmem>>, vector<1x1x32xf32>
      %148 = vector.shape_cast %147 : vector<1x1x32xf32> to vector<1x32xf32>
      %149 = vector.broadcast %148 : vector<1x32xf32> to vector<2x32xf32>
      %150 = arith.addf %146, %149 : vector<2x32xf32>
      %151 = arith.negf %150 : vector<2x32xf32>
      %152 = math.exp %151 : vector<2x32xf32>
      %cst_112 = arith.constant 1.000000e+00 : f32
      %153 = vector.broadcast %cst_112 : f32 to vector<2x32xf32>
      %154 = arith.addf %153, %152 : vector<2x32xf32>
      %155 = arith.divf %153, %154 : vector<2x32xf32>
      %156 = arith.mulf %127, %139 : vector<2x32xf32>
      %157 = math.tanh %156 : vector<2x32xf32>
      %158 = arith.mulf %155, %157 : vector<2x32xf32>
      %c3_113 = arith.constant 3 : index
      %c0_114 = arith.constant 0 : index
      %c0_115 = arith.constant 0 : index
      %159 = vector.load %arg8[%c3_113, %c0_114, %c0_115] : memref<6x32x32xf32, #tpu.memory_space<vmem>>, vector<1x32x32xf32>
      %160 = vector.shape_cast %159 : vector<1x32x32xf32> to vector<32x32xf32>
      %cst_116 = arith.constant dense<0.000000e+00> : vector<2x32xf32>
      %161 = tpu.matmul %71, %160, %cst_116 {dimension_numbers = #tpu.dot_dimension_numbers<[1], [0], [0], [1], [0, 0, 1, 1], [], []>} : vector<2x32xf32>, vector<32x32xf32>, vector<2x32xf32> -> vector<2x32xf32>
      %c3_117 = arith.constant 3 : index
      %c0_118 = arith.constant 0 : index
      %c0_119 = arith.constant 0 : index
      %162 = vector.load %arg9[%c3_117, %c0_118, %c0_119] : memref<6x32x32xf32, #tpu.memory_space<vmem>>, vector<1x32x32xf32>
      %163 = vector.shape_cast %162 : vector<1x32x32xf32> to vector<32x32xf32>
      %cst_120 = arith.constant dense<0.000000e+00> : vector<2x32xf32>
      %164 = tpu.matmul %111, %163, %cst_120 {dimension_numbers = #tpu.dot_dimension_numbers<[1], [0], [0], [1], [0, 0, 1, 1], [], []>} : vector<2x32xf32>, vector<32x32xf32>, vector<2x32xf32> -> vector<2x32xf32>
      %165 = arith.addf %161, %164 : vector<2x32xf32>
      %c3_121 = arith.constant 3 : index
      %c0_122 = arith.constant 0 : index
      %c0_123 = arith.constant 0 : index
      %166 = vector.load %arg10[%c3_121, %c0_122, %c0_123] : memref<6x1x32xf32, #tpu.memory_space<vmem>>, vector<1x1x32xf32>
      %167 = vector.shape_cast %166 : vector<1x1x32xf32> to vector<1x32xf32>
      %168 = vector.broadcast %167 : vector<1x32xf32> to vector<2x32xf32>
      %169 = arith.addf %165, %168 : vector<2x32xf32>
      %170 = arith.negf %169 : vector<2x32xf32>
      %171 = math.exp %170 : vector<2x32xf32>
      %cst_124 = arith.constant 1.000000e+00 : f32
      %172 = vector.broadcast %cst_124 : f32 to vector<2x32xf32>
      %173 = arith.addf %172, %171 : vector<2x32xf32>
      %174 = arith.divf %172, %173 : vector<2x32xf32>
      %c4 = arith.constant 4 : index
      %c0_125 = arith.constant 0 : index
      %c0_126 = arith.constant 0 : index
      %175 = vector.load %arg8[%c4, %c0_125, %c0_126] : memref<6x32x32xf32, #tpu.memory_space<vmem>>, vector<1x32x32xf32>
      %176 = vector.shape_cast %175 : vector<1x32x32xf32> to vector<32x32xf32>
      %cst_127 = arith.constant dense<0.000000e+00> : vector<2x32xf32>
      %177 = tpu.matmul %71, %176, %cst_127 {dimension_numbers = #tpu.dot_dimension_numbers<[1], [0], [0], [1], [0, 0, 1, 1], [], []>} : vector<2x32xf32>, vector<32x32xf32>, vector<2x32xf32> -> vector<2x32xf32>
      %c4_128 = arith.constant 4 : index
      %c0_129 = arith.constant 0 : index
      %c0_130 = arith.constant 0 : index
      %178 = vector.load %arg9[%c4_128, %c0_129, %c0_130] : memref<6x32x32xf32, #tpu.memory_space<vmem>>, vector<1x32x32xf32>
      %179 = vector.shape_cast %178 : vector<1x32x32xf32> to vector<32x32xf32>
      %cst_131 = arith.constant dense<0.000000e+00> : vector<2x32xf32>
      %180 = tpu.matmul %111, %179, %cst_131 {dimension_numbers = #tpu.dot_dimension_numbers<[1], [0], [0], [1], [0, 0, 1, 1], [], []>} : vector<2x32xf32>, vector<32x32xf32>, vector<2x32xf32> -> vector<2x32xf32>
      %181 = arith.addf %177, %180 : vector<2x32xf32>
      %c4_132 = arith.constant 4 : index
      %c0_133 = arith.constant 0 : index
      %c0_134 = arith.constant 0 : index
      %182 = vector.load %arg10[%c4_132, %c0_133, %c0_134] : memref<6x1x32xf32, #tpu.memory_space<vmem>>, vector<1x1x32xf32>
      %183 = vector.shape_cast %182 : vector<1x1x32xf32> to vector<1x32xf32>
      %184 = vector.broadcast %183 : vector<1x32xf32> to vector<2x32xf32>
      %185 = arith.addf %181, %184 : vector<2x32xf32>
      %186 = math.tanh %185 : vector<2x32xf32>
      %c5 = arith.constant 5 : index
      %c0_135 = arith.constant 0 : index
      %c0_136 = arith.constant 0 : index
      %187 = vector.load %arg8[%c5, %c0_135, %c0_136] : memref<6x32x32xf32, #tpu.memory_space<vmem>>, vector<1x32x32xf32>
      %188 = vector.shape_cast %187 : vector<1x32x32xf32> to vector<32x32xf32>
      %cst_137 = arith.constant dense<0.000000e+00> : vector<2x32xf32>
      %189 = tpu.matmul %71, %188, %cst_137 {dimension_numbers = #tpu.dot_dimension_numbers<[1], [0], [0], [1], [0, 0, 1, 1], [], []>} : vector<2x32xf32>, vector<32x32xf32>, vector<2x32xf32> -> vector<2x32xf32>
      %c5_138 = arith.constant 5 : index
      %c0_139 = arith.constant 0 : index
      %c0_140 = arith.constant 0 : index
      %190 = vector.load %arg9[%c5_138, %c0_139, %c0_140] : memref<6x32x32xf32, #tpu.memory_space<vmem>>, vector<1x32x32xf32>
      %191 = vector.shape_cast %190 : vector<1x32x32xf32> to vector<32x32xf32>
      %cst_141 = arith.constant dense<0.000000e+00> : vector<2x32xf32>
      %192 = tpu.matmul %111, %191, %cst_141 {dimension_numbers = #tpu.dot_dimension_numbers<[1], [0], [0], [1], [0, 0, 1, 1], [], []>} : vector<2x32xf32>, vector<32x32xf32>, vector<2x32xf32> -> vector<2x32xf32>
      %193 = arith.addf %189, %192 : vector<2x32xf32>
      %c5_142 = arith.constant 5 : index
      %c0_143 = arith.constant 0 : index
      %c0_144 = arith.constant 0 : index
      %194 = vector.load %arg10[%c5_142, %c0_143, %c0_144] : memref<6x1x32xf32, #tpu.memory_space<vmem>>, vector<1x1x32xf32>
      %195 = vector.shape_cast %194 : vector<1x1x32xf32> to vector<1x32xf32>
      %196 = vector.broadcast %195 : vector<1x32xf32> to vector<2x32xf32>
      %197 = arith.addf %193, %196 : vector<2x32xf32>
      %198 = arith.negf %197 : vector<2x32xf32>
      %199 = math.exp %198 : vector<2x32xf32>
      %cst_145 = arith.constant 1.000000e+00 : f32
      %200 = vector.broadcast %cst_145 : f32 to vector<2x32xf32>
      %201 = arith.addf %200, %199 : vector<2x32xf32>
      %202 = arith.divf %200, %201 : vector<2x32xf32>
      %203 = arith.mulf %174, %186 : vector<2x32xf32>
      %204 = math.tanh %203 : vector<2x32xf32>
      %205 = arith.mulf %202, %204 : vector<2x32xf32>
      %c0_146 = arith.constant 0 : index
      %c0_147 = arith.constant 0 : index
      %206 = vector.load %arg11[%c0_146, %c0_147] : memref<32x1xf32, #tpu.memory_space<vmem>>, vector<32x1xf32>
      %cst_148 = arith.constant dense<0.000000e+00> : vector<2x1xf32>
      %207 = tpu.matmul %158, %206, %cst_148 {dimension_numbers = #tpu.dot_dimension_numbers<[1], [0], [0], [1], [0, 0, 1, 1], [], []>} : vector<2x32xf32>, vector<32x1xf32>, vector<2x1xf32> -> vector<2x1xf32>
      %c0_149 = arith.constant 0 : index
      %c0_150 = arith.constant 0 : index
      %208 = vector.load %arg12[%c0_149, %c0_150] : memref<32x1xf32, #tpu.memory_space<vmem>>, vector<32x1xf32>
      %cst_151 = arith.constant dense<0.000000e+00> : vector<2x1xf32>
      %209 = tpu.matmul %205, %208, %cst_151 {dimension_numbers = #tpu.dot_dimension_numbers<[1], [0], [0], [1], [0, 0, 1, 1], [], []>} : vector<2x32xf32>, vector<32x1xf32>, vector<2x1xf32> -> vector<2x1xf32>
      %210 = arith.addf %207, %209 : vector<2x1xf32>
      %c0_152 = arith.constant 0 : index
      %c0_153 = arith.constant 0 : index
      %211 = vector.load %arg13[%c0_152, %c0_153] : memref<1x1xf32, #tpu.memory_space<vmem>>, vector<1x1xf32>
      %212 = vector.broadcast %211 : vector<1x1xf32> to vector<2x1xf32>
      %213 = arith.addf %210, %212 : vector<2x1xf32>
      %c0_154 = arith.constant 0 : index
      %c0_155 = arith.constant 0 : index
      %214 = vector.load %arg14[%c0_154, %c0_155] : memref<2x1xf32, #tpu.memory_space<vmem>>, vector<2x1xf32>
      tpu.vector_store %arg14[%c0_154, %c0_155], %213 {strides = array<i32>} : memref<2x1xf32, #tpu.memory_space<vmem>>, vector<2x1xf32>,
    } else {
    }
    return
  }
  func.func @transform_0(%arg0: i32, %arg1: i32) -> (i32, i32, i32) {
    %c0_i32 = arith.constant 0 : i32
    %c0_i32_0 = arith.constant 0 : i32
    return %arg1, %arg0, %c0_i32 : i32, i32, i32
  }
  func.func @transform_1(%arg0: i32, %arg1: i32) -> (i32, i32, i32) {
    %c0_i32 = arith.constant 0 : i32
    %c0_i32_0 = arith.constant 0 : i32
    %c0_i32_1 = arith.constant 0 : i32
    %c0_i32_2 = arith.constant 0 : i32
    return %c0_i32, %c0_i32_0, %c0_i32_1 : i32, i32, i32
  }
  func.func @transform_2(%arg0: i32, %arg1: i32) -> (i32, i32, i32) {
    %c0_i32 = arith.constant 0 : i32
    %c0_i32_0 = arith.constant 0 : i32
    %c0_i32_1 = arith.constant 0 : i32
    %c0_i32_2 = arith.constant 0 : i32
    return %c0_i32, %c0_i32_0, %c0_i32_1 : i32, i32, i32
  }
  func.func @transform_3(%arg0: i32, %arg1: i32) -> (i32, i32, i32) {
    %c0_i32 = arith.constant 0 : i32
    %c0_i32_0 = arith.constant 0 : i32
    %c0_i32_1 = arith.constant 0 : i32
    %c0_i32_2 = arith.constant 0 : i32
    return %c0_i32, %c0_i32_0, %c0_i32_1 : i32, i32, i32
  }
  func.func @transform_4(%arg0: i32, %arg1: i32) -> (i32, i32, i32) {
    %c0_i32 = arith.constant 0 : i32
    %c0_i32_0 = arith.constant 0 : i32
    %c0_i32_1 = arith.constant 0 : i32
    %c0_i32_2 = arith.constant 0 : i32
    return %c0_i32, %c0_i32_0, %c0_i32_1 : i32, i32, i32
  }
  func.func @transform_5(%arg0: i32, %arg1: i32) -> (i32, i32, i32) {
    %c0_i32 = arith.constant 0 : i32
    %c0_i32_0 = arith.constant 0 : i32
    %c0_i32_1 = arith.constant 0 : i32
    %c0_i32_2 = arith.constant 0 : i32
    return %c0_i32, %c0_i32_0, %c0_i32_1 : i32, i32, i32
  }
  func.func @transform_6(%arg0: i32, %arg1: i32) -> (i32, i32, i32) {
    %c0_i32 = arith.constant 0 : i32
    %c0_i32_0 = arith.constant 0 : i32
    %c0_i32_1 = arith.constant 0 : i32
    %c0_i32_2 = arith.constant 0 : i32
    return %c0_i32, %c0_i32_0, %c0_i32_1 : i32, i32, i32
  }
  func.func @transform_7(%arg0: i32, %arg1: i32) -> (i32, i32, i32) {
    %c0_i32 = arith.constant 0 : i32
    %c0_i32_0 = arith.constant 0 : i32
    %c0_i32_1 = arith.constant 0 : i32
    %c0_i32_2 = arith.constant 0 : i32
    return %c0_i32, %c0_i32_0, %c0_i32_1 : i32, i32, i32
  }
  func.func @transform_8(%arg0: i32, %arg1: i32) -> (i32, i32, i32) {
    %c0_i32 = arith.constant 0 : i32
    %c0_i32_0 = arith.constant 0 : i32
    %c0_i32_1 = arith.constant 0 : i32
    %c0_i32_2 = arith.constant 0 : i32
    return %c0_i32, %c0_i32_0, %c0_i32_1 : i32, i32, i32
  }
  func.func @transform_9(%arg0: i32, %arg1: i32) -> (i32, i32) {
    %c0_i32 = arith.constant 0 : i32
    %c0_i32_0 = arith.constant 0 : i32
    %c0_i32_1 = arith.constant 0 : i32
    return %c0_i32, %c0_i32_0 : i32, i32
  }
  func.func @transform_10(%arg0: i32, %arg1: i32) -> (i32, i32) {
    %c0_i32 = arith.constant 0 : i32
    %c0_i32_0 = arith.constant 0 : i32
    %c0_i32_1 = arith.constant 0 : i32
    return %c0_i32, %c0_i32_0 : i32, i32
  }
  func.func @transform_11(%arg0: i32, %arg1: i32) -> (i32, i32) {
    %c0_i32 = arith.constant 0 : i32
    %c0_i32_0 = arith.constant 0 : i32
    %c0_i32_1 = arith.constant 0 : i32
    return %c0_i32, %c0_i32_0 : i32, i32
  }
  func.func @transform_12(%arg0: i32, %arg1: i32) -> (i32, i32) {
    %c0_i32 = arith.constant 0 : i32
    %c0_i32_0 = arith.constant 0 : i32
    return %arg0, %c0_i32 : i32, i32
  }
}

</mosaic_0001>

<llo_original>
// kernel: lstm_model_forward.1
$region0: #{lstm_model_forward.1}
  #allocation0 [shape = 'u32[]', space=smem, size = 0x4, offset = 0x4, fixed_abs, tag = 'smem constant byte address 0x4 - core index']
  #allocation1 [shape = 'u32[72,128]{1,0:T(1,128)}', space=vmem, size = 0x9000, scoped, tag = 'internal scratch']
  #allocation2 [shape = 'f32[2,32]{1,0:T(2,128)}', space=vmem, size = 0x400, scoped, tag = 'scratch operand']
  #allocation3 [shape = 'f32[2,32]{1,0:T(2,128)}', space=vmem, size = 0x400, scoped, tag = 'scratch operand']
  #allocation4 [shape = 'f32[1,1]{1,0:T(1,128)S(1)}', space=vmem, size = 0x200, scoped, tag = 'scoped memory for lstm_model_forward.1']
  %s0 = inlined_call_operand.vmem [shape: f32[8,2,4], index: 0, kind: input, shape index: {}]
  %s1 = inlined_call_operand.vmem [shape: f32[4,4,32], index: 1, kind: input, shape index: {}]
  %s2 = inlined_call_operand.vmem [shape: f32[4,32,32], index: 2, kind: input, shape index: {}]
  %s3 = inlined_call_operand.vmem [shape: f32[4,1,32], index: 3, kind: input, shape index: {}]
  %s4 = inlined_call_operand.vmem [shape: f32[3,4,32], index: 4, kind: input, shape index: {}]
  %s5 = inlined_call_operand.vmem [shape: f32[3,1,32], index: 5, kind: input, shape index: {}]
  %s6 = inlined_call_operand.vmem [shape: f32[6,32,32], index: 6, kind: input, shape index: {}]
  %s7 = inlined_call_operand.vmem [shape: f32[6,32,32], index: 7, kind: input, shape index: {}]
  %s8 = inlined_call_operand.vmem [shape: f32[6,1,32], index: 8, kind: input, shape index: {}]
  %s9 = inlined_call_operand.vmem [shape: f32[32,1], index: 9, kind: input, shape index: {}]
  %s10 = inlined_call_operand.vmem [shape: f32[32,1], index: 10, kind: input, shape index: {}]
  %s11 = inlined_call_operand.<no memory space> [shape: f32[1,1], index: 11, kind: input, shape index: {}]
  %s12 = inlined_call_operand.vmem [shape: f32[2,1], index: 12, kind: output, shape index: {}]
  %s13 = sld [smem:[#allocation0]]
  $region89: #{lstm_model_forward.1} parent=0
    _
  %s15 = ssub.s32 1, %s13
  %s16 = scalar_select 0, %s15, %s13
  %v17 = vstv %s11
  %18 = vst [vmem:[#allocation4] sm:$0x1] %v17
  loop: start=0, step=1, limit=10
  $region2: #{lstm_model_forward.1} parent=0 // loop_pre_header
    _
  $region3: #{lstm_model_forward.1} parent=0 // loop_header
    %s20 = sphi 0, %s24
    %p21 = scmp.ge.s32.totalorder %s20, 10
    %s27 = sphi 0, %s39
    %s28 = sphi 0, %s35
    %s29 = sphi 0, %s27
    %s30 = sphi 0, %s28
    %s31 = sphi 0, %s29
    %s32 = sphi 0, %s30
    %s44 = sphi 0, %s46
    %s47 = sphi 0, %s44
    %s48 = sphi 0, %s47
    %s64 = sphi 0, %s48
    %s68 = sphi 0, %s68
    %s70 = sphi 0, %s68
    %s71 = sphi 0, %s70
    %s85 = sphi 0, %s71
    %s89 = sphi 0, %s89
    %s91 = sphi 0, %s89
    %s92 = sphi 0, %s91
    %s106 = sphi 0, %s92
    %s110 = sphi 0, %s110
    %s112 = sphi 0, %s110
    %s113 = sphi 0, %s112
    %s127 = sphi 0, %s113
    %s131 = sphi 0, %s131
    %s133 = sphi 0, %s131
    %s134 = sphi 0, %s133
    %s148 = sphi 0, %s134
    %s152 = sphi 0, %s152
    %s154 = sphi 0, %s152
    %s155 = sphi 0, %s154
    %s169 = sphi 0, %s155
    %s173 = sphi 0, %s173
    %s175 = sphi 0, %s173
    %s176 = sphi 0, %s175
    %s190 = sphi 0, %s176
    %s194 = sphi 0, %s194
    %s196 = sphi 0, %s194
    %s197 = sphi 0, %s196
    %s211 = sphi 0, %s197
    %s215 = sphi 0, %s215
    %s217 = sphi 0, %s215
    %s218 = sphi 0, %s217
    %s232 = sphi 0, %s218
    %s236 = sphi 0, %s236
    %s238 = sphi 0, %s236
    %s239 = sphi 0, %s238
    %s253 = sphi 0, %s239
    %s257 = sphi 0, %s257
    %s259 = sphi 0, %s257
    %s260 = sphi 0, %s259
    %s274 = sphi 0, %s260
    %s278 = sphi 0, %s278
    %s280 = sphi 0, %s278
    %s281 = sphi 0, %s280
    %s295 = sphi 0, %s281
    %s301 = sphi 0, %s303
    %s304 = sphi 0, %s301
    %s305 = sphi 0, %s304
    %s321 = sphi 0, %s305
  $region4: #{lstm_model_forward.1} parent=0 // loop_header_branch
    %23 = sbr.rel (%p21) target = $region8
  $region5: #{lstm_model_forward.1} parent=0 // loop_body
    %s25 = ssub.s32 %s20, 1
    %s26 = ssub.s32 %s20, 2
    %s33 = sadd.s32 1, %s28
    %p34 = scmp.ge.s32.totalorder %s33, 8
    %s35 = scalar_select %p34, 0, %s33
    %s36 = sadd.s32 1, %s27
    %s37 = scalar_select %p34, %s36, %s27
    %p38 = scmp.ge.s32.totalorder %s37, 1
    %s39 = scalar_select %p38, 0, %s37
    %s40 = ssub.s32 %s28, %s35
    %s41 = ssub.s32 %s27, %s39
    %s42 = sor.u32 %s40, %s41
    %p43 = scmp.eq.s32.totalorder %s42, 0
    %s45 = sadd.s32 %s44, 1
    %s46 = scalar_select %p43, %s44, %s45
    %p49 = pneg %p43
    %p50 = scmp.eq.s32.totalorder %s20, 7
    %p51 = por %p49, %p50
    %p52 = scmp.ne.s32.totalorder %s44, %s47
    %p53 = scmp.eq.s32.totalorder %s20, 0
    %p54 = por %p52, %p53
    %p55 = scmp.ne.s32.totalorder %s44, %s47
    %p56 = scmp.eq.s32.totalorder %s25, 7
    %p57 = por %p55, %p56
    %p58 = scmp.ne.s32.totalorder %s47, %s48
    %p59 = scmp.eq.s32.totalorder %s25, 0
    %p60 = por %p58, %p59
    %p61 = scmp.ne.s32.totalorder %s47, %s48
    %p62 = scmp.eq.s32.totalorder %s26, 7
    %p63 = por %p61, %p62
    %p65 = scmp.ne.s32.totalorder %s48, %s64
    %p66 = scmp.eq.s32.totalorder %s26, 0
    %p67 = por %p65, %p66
    %s69 = sadd.s32 %s68, 1
    %p72 = scmp.eq.s32.totalorder %s20, 7
    %p73 = scmp.ne.s32.totalorder %s68, %s70
    %p74 = scmp.eq.s32.totalorder %s20, 0
    %p75 = por %p73, %p74
    %p76 = scmp.ne.s32.totalorder %s68, %s70
    %p77 = scmp.eq.s32.totalorder %s25, 7
    %p78 = por %p76, %p77
    %p79 = scmp.ne.s32.totalorder %s70, %s71
    %p80 = scmp.eq.s32.totalorder %s25, 0
    %p81 = por %p79, %p80
    %p82 = scmp.ne.s32.totalorder %s70, %s71
    %p83 = scmp.eq.s32.totalorder %s26, 7
    %p84 = por %p82, %p83
    %p86 = scmp.ne.s32.totalorder %s71, %s85
    %p87 = scmp.eq.s32.totalorder %s26, 0
    %p88 = por %p86, %p87
    %s90 = sadd.s32 %s89, 1
    %p93 = scmp.eq.s32.totalorder %s20, 7
    %p94 = scmp.ne.s32.totalorder %s89, %s91
    %p95 = scmp.eq.s32.totalorder %s20, 0
    %p96 = por %p94, %p95
    %p97 = scmp.ne.s32.totalorder %s89, %s91
    %p98 = scmp.eq.s32.totalorder %s25, 7
    %p99 = por %p97, %p98
    %p100 = scmp.ne.s32.totalorder %s91, %s92
    %p101 = scmp.eq.s32.totalorder %s25, 0
    %p102 = por %p100, %p101
    %p103 = scmp.ne.s32.totalorder %s91, %s92
    %p104 = scmp.eq.s32.totalorder %s26, 7
    %p105 = por %p103, %p104
    %p107 = scmp.ne.s32.totalorder %s92, %s106
    %p108 = scmp.eq.s32.totalorder %s26, 0
    %p109 = por %p107, %p108
    %s111 = sadd.s32 %s110, 1
    %p114 = scmp.eq.s32.totalorder %s20, 7
    %p115 = scmp.ne.s32.totalorder %s110, %s112
    %p116 = scmp.eq.s32.totalorder %s20, 0
    %p117 = por %p115, %p116
    %p118 = scmp.ne.s32.totalorder %s110, %s112
    %p119 = scmp.eq.s32.totalorder %s25, 7
    %p120 = por %p118, %p119
    %p121 = scmp.ne.s32.totalorder %s112, %s113
    %p122 = scmp.eq.s32.totalorder %s25, 0
    %p123 = por %p121, %p122
    %p124 = scmp.ne.s32.totalorder %s112, %s113
    %p125 = scmp.eq.s32.totalorder %s26, 7
    %p126 = por %p124, %p125
    %p128 = scmp.ne.s32.totalorder %s113, %s127
    %p129 = scmp.eq.s32.totalorder %s26, 0
    %p130 = por %p128, %p129
    %s132 = sadd.s32 %s131, 1
    %p135 = scmp.eq.s32.totalorder %s20, 7
    %p136 = scmp.ne.s32.totalorder %s131, %s133
    %p137 = scmp.eq.s32.totalorder %s20, 0
    %p138 = por %p136, %p137
    %p139 = scmp.ne.s32.totalorder %s131, %s133
    %p140 = scmp.eq.s32.totalorder %s25, 7
    %p141 = por %p139, %p140
    %p142 = scmp.ne.s32.totalorder %s133, %s134
    %p143 = scmp.eq.s32.totalorder %s25, 0
    %p144 = por %p142, %p143
    %p145 = scmp.ne.s32.totalorder %s133, %s134
    %p146 = scmp.eq.s32.totalorder %s26, 7
    %p147 = por %p145, %p146
    %p149 = scmp.ne.s32.totalorder %s134, %s148
    %p150 = scmp.eq.s32.totalorder %s26, 0
    %p151 = por %p149, %p150
    %s153 = sadd.s32 %s152, 1
    %p156 = scmp.eq.s32.totalorder %s20, 7
    %p157 = scmp.ne.s32.totalorder %s152, %s154
    %p158 = scmp.eq.s32.totalorder %s20, 0
    %p159 = por %p157, %p158
    %p160 = scmp.ne.s32.totalorder %s152, %s154
    %p161 = scmp.eq.s32.totalorder %s25, 7
    %p162 = por %p160, %p161
    %p163 = scmp.ne.s32.totalorder %s154, %s155
    %p164 = scmp.eq.s32.totalorder %s25, 0
    %p165 = por %p163, %p164
    %p166 = scmp.ne.s32.totalorder %s154, %s155
    %p167 = scmp.eq.s32.totalorder %s26, 7
    %p168 = por %p166, %p167
    %p170 = scmp.ne.s32.totalorder %s155, %s169
    %p171 = scmp.eq.s32.totalorder %s26, 0
    %p172 = por %p170, %p171
    %s174 = sadd.s32 %s173, 1
    %p177 = scmp.eq.s32.totalorder %s20, 7
    %p178 = scmp.ne.s32.totalorder %s173, %s175
    %p179 = scmp.eq.s32.totalorder %s20, 0
    %p180 = por %p178, %p179
    %p181 = scmp.ne.s32.totalorder %s173, %s175
    %p182 = scmp.eq.s32.totalorder %s25, 7
    %p183 = por %p181, %p182
    %p184 = scmp.ne.s32.totalorder %s175, %s176
    %p185 = scmp.eq.s32.totalorder %s25, 0
    %p186 = por %p184, %p185
    %p187 = scmp.ne.s32.totalorder %s175, %s176
    %p188 = scmp.eq.s32.totalorder %s26, 7
    %p189 = por %p187, %p188
    %p191 = scmp.ne.s32.totalorder %s176, %s190
    %p192 = scmp.eq.s32.totalorder %s26, 0
    %p193 = por %p191, %p192
    %s195 = sadd.s32 %s194, 1
    %p198 = scmp.eq.s32.totalorder %s20, 7
    %p199 = scmp.ne.s32.totalorder %s194, %s196
    %p200 = scmp.eq.s32.totalorder %s20, 0
    %p201 = por %p199, %p200
    %p202 = scmp.ne.s32.totalorder %s194, %s196
    %p203 = scmp.eq.s32.totalorder %s25, 7
    %p204 = por %p202, %p203
    %p205 = scmp.ne.s32.totalorder %s196, %s197
    %p206 = scmp.eq.s32.totalorder %s25, 0
    %p207 = por %p205, %p206
    %p208 = scmp.ne.s32.totalorder %s196, %s197
    %p209 = scmp.eq.s32.totalorder %s26, 7
    %p210 = por %p208, %p209
    %p212 = scmp.ne.s32.totalorder %s197, %s211
    %p213 = scmp.eq.s32.totalorder %s26, 0
    %p214 = por %p212, %p213
    %s216 = sadd.s32 %s215, 1
    %p219 = scmp.eq.s32.totalorder %s20, 7
    %p220 = scmp.ne.s32.totalorder %s215, %s217
    %p221 = scmp.eq.s32.totalorder %s20, 0
    %p222 = por %p220, %p221
    %p223 = scmp.ne.s32.totalorder %s215, %s217
    %p224 = scmp.eq.s32.totalorder %s25, 7
    %p225 = por %p223, %p224
    %p226 = scmp.ne.s32.totalorder %s217, %s218
    %p227 = scmp.eq.s32.totalorder %s25, 0
    %p228 = por %p226, %p227
    %p229 = scmp.ne.s32.totalorder %s217, %s218
    %p230 = scmp.eq.s32.totalorder %s26, 7
    %p231 = por %p229, %p230
    %p233 = scmp.ne.s32.totalorder %s218, %s232
    %p234 = scmp.eq.s32.totalorder %s26, 0
    %p235 = por %p233, %p234
    %s237 = sadd.s32 %s236, 1
    %p240 = scmp.eq.s32.totalorder %s20, 7
    %p241 = scmp.ne.s32.totalorder %s236, %s238
    %p242 = scmp.eq.s32.totalorder %s20, 0
    %p243 = por %p241, %p242
    %p244 = scmp.ne.s32.totalorder %s236, %s238
    %p245 = scmp.eq.s32.totalorder %s25, 7
    %p246 = por %p244, %p245
    %p247 = scmp.ne.s32.totalorder %s238, %s239
    %p248 = scmp.eq.s32.totalorder %s25, 0
    %p249 = por %p247, %p248
    %p250 = scmp.ne.s32.totalorder %s238, %s239
    %p251 = scmp.eq.s32.totalorder %s26, 7
    %p252 = por %p250, %p251
    %p254 = scmp.ne.s32.totalorder %s239, %s253
    %p255 = scmp.eq.s32.totalorder %s26, 0
    %p256 = por %p254, %p255
    %s258 = sadd.s32 %s257, 1
    %p261 = scmp.eq.s32.totalorder %s20, 7
    %p262 = scmp.ne.s32.totalorder %s257, %s259
    %p263 = scmp.eq.s32.totalorder %s20, 0
    %p264 = por %p262, %p263
    %p265 = scmp.ne.s32.totalorder %s257, %s259
    %p266 = scmp.eq.s32.totalorder %s25, 7
    %p267 = por %p265, %p266
    %p268 = scmp.ne.s32.totalorder %s259, %s260
    %p269 = scmp.eq.s32.totalorder %s25, 0
    %p270 = por %p268, %p269
    %p271 = scmp.ne.s32.totalorder %s259, %s260
    %p272 = scmp.eq.s32.totalorder %s26, 7
    %p273 = por %p271, %p272
    %p275 = scmp.ne.s32.totalorder %s260, %s274
    %p276 = scmp.eq.s32.totalorder %s26, 0
    %p277 = por %p275, %p276
    %s279 = sadd.s32 %s278, 1
    %p282 = scmp.eq.s32.totalorder %s20, 7
    %p283 = scmp.ne.s32.totalorder %s278, %s280
    %p284 = scmp.eq.s32.totalorder %s20, 0
    %p285 = por %p283, %p284
    %p286 = scmp.ne.s32.totalorder %s278, %s280
    %p287 = scmp.eq.s32.totalorder %s25, 7
    %p288 = por %p286, %p287
    %p289 = scmp.ne.s32.totalorder %s280, %s281
    %p290 = scmp.eq.s32.totalorder %s25, 0
    %p291 = por %p289, %p290
    %p292 = scmp.ne.s32.totalorder %s280, %s281
    %p293 = scmp.eq.s32.totalorder %s26, 7
    %p294 = por %p292, %p293
    %p296 = scmp.ne.s32.totalorder %s281, %s295
    %p297 = scmp.eq.s32.totalorder %s26, 0
    %p298 = por %p296, %p297
    %s299 = ssub.s32 %s27, %s39
    %p300 = scmp.eq.s32.totalorder %s299, 0
    %s302 = sadd.s32 %s301, 1
    %s303 = scalar_select %p300, %s301, %s302
    %p306 = pneg %p300
    %p307 = scmp.eq.s32.totalorder %s20, 7
    %p308 = por %p306, %p307
    %p309 = scmp.ne.s32.totalorder %s301, %s304
    %p310 = scmp.eq.s32.totalorder %s20, 0
    %p311 = por %p309, %p310
    %p312 = scmp.ne.s32.totalorder %s301, %s304
    %p313 = scmp.eq.s32.totalorder %s25, 7
    %p314 = por %p312, %p313
    %p315 = scmp.ne.s32.totalorder %s304, %s305
    %p316 = scmp.eq.s32.totalorder %s25, 0
    %p317 = por %p315, %p316
    %p318 = scmp.ne.s32.totalorder %s304, %s305
    %p319 = scmp.eq.s32.totalorder %s26, 7
    %p320 = por %p318, %p319
    %p322 = scmp.ne.s32.totalorder %s305, %s321
    %p323 = scmp.eq.s32.totalorder %s26, 0
    %p324 = por %p322, %p323
    %p325 = scmp.le.s32.totalorder 1, %s20
    %p326 = scmp.lt.s32.totalorder %s20, 9
    %p327 = pnand %p325, %p326
    %p328 = pneg %p327
    // Predicated region
    $region9: #{lstm_model_forward.1} parent=5 // pred_check
      _
    $region10: #{lstm_model_forward.1} parent=5 // pred_check_branch
      %330 = sbr.rel (%p327) target = $region12
    $region11: #{lstm_model_forward.1} parent=5 // pred_region
      %s331 = ssub.s32 %s20, 1
      // Predicated region
      $region13: #{lstm_model_forward.1} parent=11 // pred_check
        %p332 = pneg %p81
      $region14: #{lstm_model_forward.1} parent=11 // pred_check_branch
        %334 = sbr.rel (%p332) target = $region16
      $region15: #{lstm_model_forward.1} parent=11 // pred_region
        _
      $region16: #{lstm_model_forward.1} parent=11 // pred_fallthru
        _
      // Predicated region
      $region17: #{lstm_model_forward.1} parent=11 // pred_check
        %p335 = pneg %p102
      $region18: #{lstm_model_forward.1} parent=11 // pred_check_branch
        %337 = sbr.rel (%p335) target = $region20
      $region19: #{lstm_model_forward.1} parent=11 // pred_region
        _
      $region20: #{lstm_model_forward.1} parent=11 // pred_fallthru
        _
      // Predicated region
      $region21: #{lstm_model_forward.1} parent=11 // pred_check
        %p338 = pneg %p123
      $region22: #{lstm_model_forward.1} parent=11 // pred_check_branch
        %340 = sbr.rel (%p338) target = $region24
      $region23: #{lstm_model_forward.1} parent=11 // pred_region
        _
      $region24: #{lstm_model_forward.1} parent=11 // pred_fallthru
        _
      // Predicated region
      $region25: #{lstm_model_forward.1} parent=11 // pred_check
        %p341 = pneg %p144
      $region26: #{lstm_model_forward.1} parent=11 // pred_check_branch
        %343 = sbr.rel (%p341) target = $region28
      $region27: #{lstm_model_forward.1} parent=11 // pred_region
        _
      $region28: #{lstm_model_forward.1} parent=11 // pred_fallthru
        _
      // Predicated region
      $region29: #{lstm_model_forward.1} parent=11 // pred_check
        %p344 = pneg %p165
      $region30: #{lstm_model_forward.1} parent=11 // pred_check_branch
        %346 = sbr.rel (%p344) target = $region32
      $region31: #{lstm_model_forward.1} parent=11 // pred_region
        _
      $region32: #{lstm_model_forward.1} parent=11 // pred_fallthru
        _
      // Predicated region
      $region33: #{lstm_model_forward.1} parent=11 // pred_check
        %p347 = pneg %p186
      $region34: #{lstm_model_forward.1} parent=11 // pred_check_branch
        %349 = sbr.rel (%p347) target = $region36
      $region35: #{lstm_model_forward.1} parent=11 // pred_region
        _
      $region36: #{lstm_model_forward.1} parent=11 // pred_fallthru
        _
      // Predicated region
      $region37: #{lstm_model_forward.1} parent=11 // pred_check
        %p350 = pneg %p207
      $region38: #{lstm_model_forward.1} parent=11 // pred_check_branch
        %352 = sbr.rel (%p350) target = $region40
      $region39: #{lstm_model_forward.1} parent=11 // pred_region
        _
      $region40: #{lstm_model_forward.1} parent=11 // pred_fallthru
        _
      // Predicated region
      $region41: #{lstm_model_forward.1} parent=11 // pred_check
        %p353 = pneg %p228
      $region42: #{lstm_model_forward.1} parent=11 // pred_check_branch
        %355 = sbr.rel (%p353) target = $region44
      $region43: #{lstm_model_forward.1} parent=11 // pred_region
        _
      $region44: #{lstm_model_forward.1} parent=11 // pred_fallthru
        _
      // Predicated region
      $region45: #{lstm_model_forward.1} parent=11 // pred_check
        %p356 = pneg %p249
      $region46: #{lstm_model_forward.1} parent=11 // pred_check_branch
        %358 = sbr.rel (%p356) target = $region48
      $region47: #{lstm_model_forward.1} parent=11 // pred_region
        _
      $region48: #{lstm_model_forward.1} parent=11 // pred_fallthru
        _
      // Predicated region
      $region49: #{lstm_model_forward.1} parent=11 // pred_check
        %p359 = pneg %p270
      $region50: #{lstm_model_forward.1} parent=11 // pred_check_branch
        %361 = sbr.rel (%p359) target = $region52
      $region51: #{lstm_model_forward.1} parent=11 // pred_region
        _
      $region52: #{lstm_model_forward.1} parent=11 // pred_fallthru
        _
      // Predicated region
      $region53: #{lstm_model_forward.1} parent=11 // pred_check
        %p362 = pneg %p291
      $region54: #{lstm_model_forward.1} parent=11 // pred_check_branch
        %364 = sbr.rel (%p362) target = $region56
      $region55: #{lstm_model_forward.1} parent=11 // pred_region
        _
      $region56: #{lstm_model_forward.1} parent=11 // pred_fallthru
        _
    $region12: #{lstm_model_forward.1} parent=5 // pred_fallthru
      _
    %p365 = scmp.lt.s32.totalorder %s20, 8
    // Predicated region
    $region57: #{lstm_model_forward.1} parent=5 // pred_check
      %p366 = pneg %p365
    $region58: #{lstm_model_forward.1} parent=5 // pred_check_branch
      %368 = sbr.rel (%p366) target = $region60
    $region59: #{lstm_model_forward.1} parent=5 // pred_region
      // Predicated region
      $region61: #{lstm_model_forward.1} parent=59 // pred_check
        %p369 = pneg %p54
      $region62: #{lstm_model_forward.1} parent=59 // pred_check_branch
        %371 = sbr.rel (%p369) target = $region64
      $region63: #{lstm_model_forward.1} parent=59 // pred_region
        %p372 = scmp.lt.s32.totalorder %s28, 7
        %s373 = scalar_select %p372, %s28, 7
        %p374 = scmp.lt.s32.totalorder %s27, 0
        %s375 = scalar_select %p374, %s27, 0
        %s376 = sadd.s32 %s375, %s373
        %s377 = smul.addr %s376, 2
        %s378 = scalar_lea.vmem %s0, %s377
      $region64: #{lstm_model_forward.1} parent=59 // pred_fallthru
        _
    $region60: #{lstm_model_forward.1} parent=5 // pred_fallthru
      _
    %p379 = scmp.le.s32.totalorder 1, %s20
    %p380 = scmp.lt.s32.totalorder %s20, 9
    %p381 = pnand %p379, %p380
    %p382 = pneg %p381
    // Predicated region
    $region65: #{lstm_model_forward.1} parent=5 // pred_check
      _
    $region66: #{lstm_model_forward.1} parent=5 // pred_check_branch
      %384 = sbr.rel (%p381) target = $region68
    $region67: #{lstm_model_forward.1} parent=5 // pred_region
      %s385 = ssub.s32 %s20, 1
      %p386 = scmp.lt.s32.totalorder %s30, 7
      %s387 = scalar_select %p386, %s30, 7
      %p388 = scmp.lt.s32.totalorder %s29, 0
      %s389 = scalar_select %p388, %s29, 0
      %s390 = sadd.s32 %s389, %s387
      %s391 = smul.addr %s390, 2
      %s392 = scalar_lea.vmem %s0, %s391
      %p393 = pneg %p60
      %p394 = pneg %p57
      %p395 = pneg %p81
      %p396 = pneg %p78
      %p397 = pneg %p102
      %p398 = pneg %p99
      %p399 = pneg %p123
      %p400 = pneg %p120
      %p401 = pneg %p144
      %p402 = pneg %p141
      %p403 = pneg %p165
      %p404 = pneg %p162
      %p405 = pneg %p186
      %p406 = pneg %p183
      %p407 = pneg %p207
      %p408 = pneg %p204
      %p409 = pneg %p228
      %p410 = pneg %p225
      %p411 = pneg %p249
      %p412 = pneg %p246
      %p413 = pneg %p270
      %p414 = pneg %p267
      %p415 = pneg %p291
      %p416 = pneg %p288
      %p417 = pneg %p317
      %p418 = pneg %p314
      %p419 = scmp.lt.s32.totalorder %s29, 0
      %s420 = scalar_select %p419, %s29, 0
      %s421 = smul.addr %s420, 2
      %s422 = scalar_lea.vmem %s12, %s421
      %p423 = scmp.lt.s32.totalorder %s30, 7
      %s424 = scalar_select %p423, %s30, 7
      %p425 = scmp.lt.s32.totalorder %s29, 0
      %s426 = scalar_select %p425, %s29, 0
      %s427 = sadd.s32 %s426, %s424
      %s428 = smul.addr %s427, 2
      %s429 = scalar_lea.vmem %s0, %s428
      %p430 = scmp.lt.s32.totalorder %s29, 0
      %s431 = scalar_select %p430, %s29, 0
      %s432 = smul.addr %s431, 2
      %s433 = scalar_lea.vmem %s12, %s432
      %p434 = scmp.eq.s32.totalorder %s30, 0
      // Predicated region
      $region69: #{lstm_model_forward.1} parent=67 // pred_check
        %p435 = pneg %p434
      $region70: #{lstm_model_forward.1} parent=67 // pred_check_branch
        %437 = sbr.rel (%p435) target = $region72
      $region71: #{lstm_model_forward.1} parent=67 // pred_region
        %vm438 = vcmask 254976
        %439 = vst.msk [vmem:[#allocation2] sm:$0x3] %vm438, 0.0
        %440 = vst.msk [vmem:[#allocation3] sm:$0x3] %vm438, 0.0
      $region72: #{lstm_model_forward.1} parent=67 // pred_fallthru
        _
      %v441 = vld [vmem:[%s429] sm:$0x3]
      %v442 = vld [vmem:[#allocation2] sm:$0x3]
      %v443 = vld [vmem:[%s1] sm:$0xf]
      %v444 = vld [vmem:[%s2] sm:$0xff]
      %v445 = vld [vmem:[%s2 + $0x8] sm:$0xff]
      %v446 = vld [vmem:[%s2 + $0x10] sm:$0xff]
      %v447 = vld [vmem:[%s2 + $0x18] sm:$0xff]
      %vm448 = vcmask 261120
      %v450 = vsel %vm448, %v442, 0
      %452 = vmatpush.msra.mxu0 0.0
      %453 = vmatpush.msra.mxu0 0.0
      %454 = vmatpush.msra.mxu0 0.0
      %455 = vmatpush.msra.mxu0 0.0
      %456 = vmatpush.msra.mxu0 0.0
      %457 = vmatpush.msra.mxu0 0.0
      %458 = vmatpush.msra.mxu0 0.0
      %459 = vmatpush.msra.mxu0 0.0
      %460 = vmatpush.msra.mxu0 0.0
      %461 = vmatpush.msra.mxu0 0.0
      %462 = vmatpush.msra.mxu0 0.0
      %463 = vmatpush.msra.mxu0 0.0
      %464 = vmatpush.msra.mxu0 %v447
      %465 = vmatpush.msra.mxu0 %v446
      %466 = vmatpush.msra.mxu0 %v445
      %467 = vmatpush.msra.mxu0 %v444
      %468 = vmatmul.f32.gmra.mxu0 %v450
      %v469 = vpop.f32.mrf.mxu0
      %v470 = vadd.f32 0.0, %v469
      %471 = vdwg.mxu0
      %vm472 = vcmask 31744
      %v474 = vsel %vm472, %v441, 0
      %vm476 = vcmask 1043456
      %v478 = vsel %vm476, %v443, 0
      %480 = vmatpush.msra.mxu0 0.0
      %481 = vmatpush.msra.mxu0 0.0
      %482 = vmatpush.msra.mxu0 0.0
      %483 = vmatpush.msra.mxu0 0.0
      %484 = vmatpush.msra.mxu0 0.0
      %485 = vmatpush.msra.mxu0 0.0
      %486 = vmatpush.msra.mxu0 0.0
      %487 = vmatpush.msra.mxu0 0.0
      %488 = vmatpush.msra.mxu0 0.0
      %489 = vmatpush.msra.mxu0 0.0
      %490 = vmatpush.msra.mxu0 0.0
      %491 = vmatpush.msra.mxu0 0.0
      %492 = vmatpush.msra.mxu0 0.0
      %493 = vmatpush.msra.mxu0 0.0
      %494 = vmatpush.msra.mxu0 0.0
      %495 = vmatpush.msra.mxu0 %v478
      %496 = vmatmul.f32.gmra.mxu0 %v474
      %v497 = vpop.f32.mrf.mxu0
      %v498 = vadd.f32 %v470, %v497
      %499 = vdwg.mxu0
      %v500 = vld [vmem:[%s3] sm:$0x1]
      %v502 = vperm.slane %v500, 0
      %v504 = vadd.f32 %v498, %v502
      %s505 = scalar_lea.vmem %s1, 4
      %v506 = vld [vmem:[%s505] sm:$0xf]
      %s507 = scalar_lea.vmem %s2, 32
      %v508 = vld [vmem:[%s507] sm:$0xff]
      %v509 = vld [vmem:[%s507 + $0x8] sm:$0xff]
      %v510 = vld [vmem:[%s507 + $0x10] sm:$0xff]
      %v511 = vld [vmem:[%s507 + $0x18] sm:$0xff]
      %512 = vmatpush.msra.mxu0 0.0
      %513 = vmatpush.msra.mxu0 0.0
      %514 = vmatpush.msra.mxu0 0.0
      %515 = vmatpush.msra.mxu0 0.0
      %516 = vmatpush.msra.mxu0 0.0
      %517 = vmatpush.msra.mxu0 0.0
      %518 = vmatpush.msra.mxu0 0.0
      %519 = vmatpush.msra.mxu0 0.0
      %520 = vmatpush.msra.mxu0 0.0
      %521 = vmatpush.msra.mxu0 0.0
      %522 = vmatpush.msra.mxu0 0.0
      %523 = vmatpush.msra.mxu0 0.0
      %524 = vmatpush.msra.mxu0 %v511
      %525 = vmatpush.msra.mxu0 %v510
      %526 = vmatpush.msra.mxu0 %v509
      %527 = vmatpush.msra.mxu0 %v508
      %528 = vmatmul.f32.gmra.mxu0 %v450
      %v529 = vpop.f32.mrf.mxu0
      %v530 = vadd.f32 0.0, %v529
      %531 = vdwg.mxu0
      %v533 = vsel %vm476, %v506, 0
      %535 = vmatpush.msra.mxu0 0.0
      %536 = vmatpush.msra.mxu0 0.0
      %537 = vmatpush.msra.mxu0 0.0
      %538 = vmatpush.msra.mxu0 0.0
      %539 = vmatpush.msra.mxu0 0.0
      %540 = vmatpush.msra.mxu0 0.0
      %541 = vmatpush.msra.mxu0 0.0
      %542 = vmatpush.msra.mxu0 0.0
      %543 = vmatpush.msra.mxu0 0.0
      %544 = vmatpush.msra.mxu0 0.0
      %545 = vmatpush.msra.mxu0 0.0
      %546 = vmatpush.msra.mxu0 0.0
      %547 = vmatpush.msra.mxu0 0.0
      %548 = vmatpush.msra.mxu0 0.0
      %549 = vmatpush.msra.mxu0 0.0
      %550 = vmatpush.msra.mxu0 %v533
      %551 = vmatmul.f32.gmra.mxu0 %v474
      %v552 = vpop.f32.mrf.mxu0
      %v553 = vadd.f32 %v530, %v552
      %554 = vdwg.mxu0
      %s555 = scalar_lea.vmem %s3, 1
      %v556 = vld [vmem:[%s555] sm:$0x1]
      %v558 = vperm.slane %v556, 0
      %v560 = vadd.f32 %v553, %v558
      %s561 = scalar_lea.vmem %s1, 8
      %v562 = vld [vmem:[%s561] sm:$0xf]
      %s563 = scalar_lea.vmem %s2, 64
      %v564 = vld [vmem:[%s563] sm:$0xff]
      %v565 = vld [vmem:[%s563 + $0x8] sm:$0xff]
      %v566 = vld [vmem:[%s563 + $0x10] sm:$0xff]
      %v567 = vld [vmem:[%s563 + $0x18] sm:$0xff]
      %568 = vmatpush.msra.mxu0 0.0
      %569 = vmatpush.msra.mxu0 0.0
      %570 = vmatpush.msra.mxu0 0.0
      %571 = vmatpush.msra.mxu0 0.0
      %572 = vmatpush.msra.mxu0 0.0
      %573 = vmatpush.msra.mxu0 0.0
      %574 = vmatpush.msra.mxu0 0.0
      %575 = vmatpush.msra.mxu0 0.0
      %576 = vmatpush.msra.mxu0 0.0
      %577 = vmatpush.msra.mxu0 0.0
      %578 = vmatpush.msra.mxu0 0.0
      %579 = vmatpush.msra.mxu0 0.0
      %580 = vmatpush.msra.mxu0 %v567
      %581 = vmatpush.msra.mxu0 %v566
      %582 = vmatpush.msra.mxu0 %v565
      %583 = vmatpush.msra.mxu0 %v564
      %584 = vmatmul.f32.gmra.mxu0 %v450
      %v585 = vpop.f32.mrf.mxu0
      %v586 = vadd.f32 0.0, %v585
      %587 = vdwg.mxu0
      %v589 = vsel %vm476, %v562, 0
      %591 = vmatpush.msra.mxu0 0.0
      %592 = vmatpush.msra.mxu0 0.0
      %593 = vmatpush.msra.mxu0 0.0
      %594 = vmatpush.msra.mxu0 0.0
      %595 = vmatpush.msra.mxu0 0.0
      %596 = vmatpush.msra.mxu0 0.0
      %597 = vmatpush.msra.mxu0 0.0
      %598 = vmatpush.msra.mxu0 0.0
      %599 = vmatpush.msra.mxu0 0.0
      %600 = vmatpush.msra.mxu0 0.0
      %601 = vmatpush.msra.mxu0 0.0
      %602 = vmatpush.msra.mxu0 0.0
      %603 = vmatpush.msra.mxu0 0.0
      %604 = vmatpush.msra.mxu0 0.0
      %605 = vmatpush.msra.mxu0 0.0
      %606 = vmatpush.msra.mxu0 %v589
      %607 = vmatmul.f32.gmra.mxu0 %v474
      %v608 = vpop.f32.mrf.mxu0
      %v609 = vadd.f32 %v586, %v608
      %610 = vdwg.mxu0
      %s611 = scalar_lea.vmem %s3, 2
      %v612 = vld [vmem:[%s611] sm:$0x1]
      %v614 = vperm.slane %v612, 0
      %v616 = vadd.f32 %v609, %v614
      %s617 = scalar_lea.vmem %s1, 12
      %v618 = vld [vmem:[%s617] sm:$0xf]
      %s619 = scalar_lea.vmem %s2, 96
      %v620 = vld [vmem:[%s619] sm:$0xff]
      %v621 = vld [vmem:[%s619 + $0x8] sm:$0xff]
      %v622 = vld [vmem:[%s619 + $0x10] sm:$0xff]
      %v623 = vld [vmem:[%s619 + $0x18] sm:$0xff]
      %624 = vmatpush.msra.mxu0 0.0
      %625 = vmatpush.msra.mxu0 0.0
      %626 = vmatpush.msra.mxu0 0.0
      %627 = vmatpush.msra.mxu0 0.0
      %628 = vmatpush.msra.mxu0 0.0
      %629 = vmatpush.msra.mxu0 0.0
      %630 = vmatpush.msra.mxu0 0.0
      %631 = vmatpush.msra.mxu0 0.0
      %632 = vmatpush.msra.mxu0 0.0
      %633 = vmatpush.msra.mxu0 0.0
      %634 = vmatpush.msra.mxu0 0.0
      %635 = vmatpush.msra.mxu0 0.0
      %636 = vmatpush.msra.mxu0 %v623
      %637 = vmatpush.msra.mxu0 %v622
      %638 = vmatpush.msra.mxu0 %v621
      %639 = vmatpush.msra.mxu0 %v620
      %640 = vmatmul.f32.gmra.mxu0 %v450
      %v641 = vpop.f32.mrf.mxu0
      %v642 = vadd.f32 0.0, %v641
      %643 = vdwg.mxu0
      %v645 = vsel %vm476, %v618, 0
      %647 = vmatpush.msra.mxu0 0.0
      %648 = vmatpush.msra.mxu0 0.0
      %649 = vmatpush.msra.mxu0 0.0
      %650 = vmatpush.msra.mxu0 0.0
      %651 = vmatpush.msra.mxu0 0.0
      %652 = vmatpush.msra.mxu0 0.0
      %653 = vmatpush.msra.mxu0 0.0
      %654 = vmatpush.msra.mxu0 0.0
      %655 = vmatpush.msra.mxu0 0.0
      %656 = vmatpush.msra.mxu0 0.0
      %657 = vmatpush.msra.mxu0 0.0
      %658 = vmatpush.msra.mxu0 0.0
      %659 = vmatpush.msra.mxu0 0.0
      %660 = vmatpush.msra.mxu0 0.0
      %661 = vmatpush.msra.mxu0 0.0
      %662 = vmatpush.msra.mxu0 %v645
      %663 = vmatmul.f32.gmra.mxu0 %v474
      %v664 = vpop.f32.mrf.mxu0
      %v665 = vadd.f32 %v642, %v664
      %666 = vdwg.mxu0
      %s667 = scalar_lea.vmem %s3, 3
      %v668 = vld [vmem:[%s667] sm:$0x1]
      %v670 = vperm.slane %v668, 0
      %v672 = vadd.f32 %v665, %v670
      %v673 = vxor.u32 %v560, 2147483648
      %v674 = vmul.f32 %v673, 1.442695
      %v675 = vpow.pop %v674
      %v676 = vadd.f32 %v675, 1.0
      %v677 = vrcp.pop %v676
      %v678 = vmul.f32 %v676, %v677
      %v679 = vsub.f32 1.0, %v678
      %v680 = vmul.f32 %v677, %v679
      %v681 = vadd.f32 %v677, %v680
      %vm682 = vweird.f32 %v676
      %vm683 = vweird.f32 %v677
      %vm684 = vmor %vm682, %vm683
      %v685 = vsel %vm684, %v677, %v681
      %v686 = vand.u32 2147483647, %v676
      %vm687 = vcmp.eq.f32.partialorder %v686, 8.507059e+37
      %v688 = vand.u32 %v676, 2147483648
      %v689 = vor.u32 1.1754944e-38, %v688
      %v690 = vsel %vm687, %v689, %v685
      %v691 = vmul.f32 1.0, %v690
      %v692 = vld [vmem:[#allocation3] sm:$0x3]
      %v693 = vmul.f32 %v691, %v692
      %v694 = vxor.u32 %v504, 2147483648
      %v695 = vmul.f32 %v694, 1.442695
      %v696 = vpow.pop %v695
      %v697 = vadd.f32 %v696, 1.0
      %v698 = vrcp.pop %v697
      %v699 = vmul.f32 %v697, %v698
      %v700 = vsub.f32 1.0, %v699
      %v701 = vmul.f32 %v698, %v700
      %v702 = vadd.f32 %v698, %v701
      %vm703 = vweird.f32 %v697
      %vm704 = vweird.f32 %v698
      %vm705 = vmor %vm703, %vm704
      %v706 = vsel %vm705, %v698, %v702
      %v707 = vand.u32 2147483647, %v697
      %vm708 = vcmp.eq.f32.partialorder %v707, 8.507059e+37
      %v709 = vand.u32 %v697, 2147483648
      %v710 = vor.u32 1.1754944e-38, %v709
      %v711 = vsel %vm708, %v710, %v706
      %v712 = vmul.f32 1.0, %v711
      %v713 = vtanh.pop %v616
      %v714 = vmul.f32 %v712, %v713
      %v715 = vadd.f32 %v693, %v714
      %v716 = vxor.u32 %v672, 2147483648
      %v717 = vmul.f32 %v716, 1.442695
      %v718 = vpow.pop %v717
      %v719 = vadd.f32 %v718, 1.0
      %v720 = vrcp.pop %v719
      %v721 = vmul.f32 %v719, %v720
      %v722 = vsub.f32 1.0, %v721
      %v723 = vmul.f32 %v720, %v722
      %v724 = vadd.f32 %v720, %v723
      %vm725 = vweird.f32 %v719
      %vm726 = vweird.f32 %v720
      %vm727 = vmor %vm725, %vm726
      %v728 = vsel %vm727, %v720, %v724
      %v729 = vand.u32 2147483647, %v719
      %vm730 = vcmp.eq.f32.partialorder %v729, 8.507059e+37
      %v731 = vand.u32 %v719, 2147483648
      %v732 = vor.u32 1.1754944e-38, %v731
      %v733 = vsel %vm730, %v732, %v728
      %v734 = vmul.f32 1.0, %v733
      %v735 = vtanh.pop %v715
      %v736 = vmul.f32 %v734, %v735
      %vm737 = vcmask 254976
      %738 = vst.msk [vmem:[#allocation3] sm:$0x3] %vm737, %v715
      %739 = vst.msk [vmem:[#allocation2] sm:$0x3] %vm737, %v736
      %p740 = scmp.eq.s32.totalorder %s30, 7
      // Predicated region
      $region73: #{lstm_model_forward.1} parent=67 // pred_check
        %p741 = pneg %p740
      $region74: #{lstm_model_forward.1} parent=67 // pred_check_branch
        %743 = sbr.rel (%p741) target = $region76
      $region75: #{lstm_model_forward.1} parent=67 // pred_region
        %v744 = vld [vmem:[%s4] sm:$0xf]
        %v745 = vld [vmem:[%s5] sm:$0x1]
        %v747 = vperm.slane %v745, 0
        %v750 = vsel %vm476, %v744, 0
        %752 = vmatpush.msra.mxu0 0.0
        %753 = vmatpush.msra.mxu0 0.0
        %754 = vmatpush.msra.mxu0 0.0
        %755 = vmatpush.msra.mxu0 0.0
        %756 = vmatpush.msra.mxu0 0.0
        %757 = vmatpush.msra.mxu0 0.0
        %758 = vmatpush.msra.mxu0 0.0
        %759 = vmatpush.msra.mxu0 0.0
        %760 = vmatpush.msra.mxu0 0.0
        %761 = vmatpush.msra.mxu0 0.0
        %762 = vmatpush.msra.mxu0 0.0
        %763 = vmatpush.msra.mxu0 0.0
        %764 = vmatpush.msra.mxu0 0.0
        %765 = vmatpush.msra.mxu0 0.0
        %766 = vmatpush.msra.mxu0 0.0
        %767 = vmatpush.msra.mxu0 %v750
        %768 = vmatmul.f32.gmra.mxu0 %v474
        %v769 = vpop.f32.mrf.mxu0
        %v770 = vadd.f32 %v747, %v769
        %771 = vdwg.mxu0
        %v772 = vxor.u32 %v770, 2147483648
        %v773 = vmul.f32 %v772, 1.442695
        %v774 = vpow.pop %v773
        %v775 = vadd.f32 %v774, 1.0
        %v776 = vrcp.pop %v775
        %v777 = vmul.f32 %v775, %v776
        %v778 = vsub.f32 1.0, %v777
        %v779 = vmul.f32 %v776, %v778
        %v780 = vadd.f32 %v776, %v779
        %vm781 = vweird.f32 %v775
        %vm782 = vweird.f32 %v776
        %vm783 = vmor %vm781, %vm782
        %v784 = vsel %vm783, %v776, %v780
        %v785 = vand.u32 2147483647, %v775
        %vm786 = vcmp.eq.f32.partialorder %v785, 8.507059e+37
        %v787 = vand.u32 %v775, 2147483648
        %v788 = vor.u32 1.1754944e-38, %v787
        %v789 = vsel %vm786, %v788, %v784
        %v790 = vmul.f32 1.0, %v789
        %s791 = scalar_lea.vmem %s4, 4
        %v792 = vld [vmem:[%s791] sm:$0xf]
        %s793 = scalar_lea.vmem %s5, 1
        %v794 = vld [vmem:[%s793] sm:$0x1]
        %v796 = vperm.slane %v794, 0
        %v799 = vsel %vm476, %v792, 0
        %801 = vmatpush.msra.mxu0 0.0
        %802 = vmatpush.msra.mxu0 0.0
        %803 = vmatpush.msra.mxu0 0.0
        %804 = vmatpush.msra.mxu0 0.0
        %805 = vmatpush.msra.mxu0 0.0
        %806 = vmatpush.msra.mxu0 0.0
        %807 = vmatpush.msra.mxu0 0.0
        %808 = vmatpush.msra.mxu0 0.0
        %809 = vmatpush.msra.mxu0 0.0
        %810 = vmatpush.msra.mxu0 0.0
        %811 = vmatpush.msra.mxu0 0.0
        %812 = vmatpush.msra.mxu0 0.0
        %813 = vmatpush.msra.mxu0 0.0
        %814 = vmatpush.msra.mxu0 0.0
        %815 = vmatpush.msra.mxu0 0.0
        %816 = vmatpush.msra.mxu0 %v799
        %817 = vmatmul.f32.gmra.mxu0 %v474
        %v818 = vpop.f32.mrf.mxu0
        %v819 = vadd.f32 %v796, %v818
        %820 = vdwg.mxu0
        %v821 = vtanh.pop %v819
        %s822 = scalar_lea.vmem %s4, 8
        %v823 = vld [vmem:[%s822] sm:$0xf]
        %s824 = scalar_lea.vmem %s5, 2
        %v825 = vld [vmem:[%s824] sm:$0x1]
        %v827 = vperm.slane %v825, 0
        %v830 = vsel %vm476, %v823, 0
        %832 = vmatpush.msra.mxu0 0.0
        %833 = vmatpush.msra.mxu0 0.0
        %834 = vmatpush.msra.mxu0 0.0
        %835 = vmatpush.msra.mxu0 0.0
        %836 = vmatpush.msra.mxu0 0.0
        %837 = vmatpush.msra.mxu0 0.0
        %838 = vmatpush.msra.mxu0 0.0
        %839 = vmatpush.msra.mxu0 0.0
        %840 = vmatpush.msra.mxu0 0.0
        %841 = vmatpush.msra.mxu0 0.0
        %842 = vmatpush.msra.mxu0 0.0
        %843 = vmatpush.msra.mxu0 0.0
        %844 = vmatpush.msra.mxu0 0.0
        %845 = vmatpush.msra.mxu0 0.0
        %846 = vmatpush.msra.mxu0 0.0
        %847 = vmatpush.msra.mxu0 %v830
        %848 = vmatmul.f32.gmra.mxu0 %v474
        %v849 = vpop.f32.mrf.mxu0
        %v850 = vadd.f32 %v827, %v849
        %851 = vdwg.mxu0
        %v852 = vxor.u32 %v850, 2147483648
        %v853 = vmul.f32 %v852, 1.442695
        %v854 = vpow.pop %v853
        %v855 = vadd.f32 %v854, 1.0
        %v856 = vrcp.pop %v855
        %v857 = vmul.f32 %v855, %v856
        %v858 = vsub.f32 1.0, %v857
        %v859 = vmul.f32 %v856, %v858
        %v860 = vadd.f32 %v856, %v859
        %vm861 = vweird.f32 %v855
        %vm862 = vweird.f32 %v856
        %vm863 = vmor %vm861, %vm862
        %v864 = vsel %vm863, %v856, %v860
        %v865 = vand.u32 2147483647, %v855
        %vm866 = vcmp.eq.f32.partialorder %v865, 8.507059e+37
        %v867 = vand.u32 %v855, 2147483648
        %v868 = vor.u32 1.1754944e-38, %v867
        %v869 = vsel %vm866, %v868, %v864
        %v870 = vmul.f32 1.0, %v869
        %v871 = vmul.f32 %v790, %v821
        %v872 = vtanh.pop %v871
        %v873 = vmul.f32 %v870, %v872
        %v874 = vld [vmem:[%s6] sm:$0xff]
        %v875 = vld [vmem:[%s6 + $0x8] sm:$0xff]
        %v876 = vld [vmem:[%s6 + $0x10] sm:$0xff]
        %v877 = vld [vmem:[%s6 + $0x18] sm:$0xff]
        %v878 = vld [vmem:[%s7] sm:$0xff]
        %v879 = vld [vmem:[%s7 + $0x8] sm:$0xff]
        %v880 = vld [vmem:[%s7 + $0x10] sm:$0xff]
        %v881 = vld [vmem:[%s7 + $0x18] sm:$0xff]
        %v883 = vsel %vm448, %v873, 0
        %885 = vmatpush.msra.mxu0 0.0
        %886 = vmatpush.msra.mxu0 0.0
        %887 = vmatpush.msra.mxu0 0.0
        %888 = vmatpush.msra.mxu0 0.0
        %889 = vmatpush.msra.mxu0 0.0
        %890 = vmatpush.msra.mxu0 0.0
        %891 = vmatpush.msra.mxu0 0.0
        %892 = vmatpush.msra.mxu0 0.0
        %893 = vmatpush.msra.mxu0 0.0
        %894 = vmatpush.msra.mxu0 0.0
        %895 = vmatpush.msra.mxu0 0.0
        %896 = vmatpush.msra.mxu0 0.0
        %897 = vmatpush.msra.mxu0 %v881
        %898 = vmatpush.msra.mxu0 %v880
        %899 = vmatpush.msra.mxu0 %v879
        %900 = vmatpush.msra.mxu0 %v878
        %901 = vmatmul.f32.gmra.mxu0 %v883
        %v902 = vpop.f32.mrf.mxu0
        %v903 = vadd.f32 0.0, %v902
        %904 = vdwg.mxu0
        %v906 = vsel %vm448, %v736, 0
        %908 = vmatpush.msra.mxu0 0.0
        %909 = vmatpush.msra.mxu0 0.0
        %910 = vmatpush.msra.mxu0 0.0
        %911 = vmatpush.msra.mxu0 0.0
        %912 = vmatpush.msra.mxu0 0.0
        %913 = vmatpush.msra.mxu0 0.0
        %914 = vmatpush.msra.mxu0 0.0
        %915 = vmatpush.msra.mxu0 0.0
        %916 = vmatpush.msra.mxu0 0.0
        %917 = vmatpush.msra.mxu0 0.0
        %918 = vmatpush.msra.mxu0 0.0
        %919 = vmatpush.msra.mxu0 0.0
        %920 = vmatpush.msra.mxu0 %v877
        %921 = vmatpush.msra.mxu0 %v876
        %922 = vmatpush.msra.mxu0 %v875
        %923 = vmatpush.msra.mxu0 %v874
        %924 = vmatmul.f32.gmra.mxu0 %v906
        %v925 = vpop.f32.mrf.mxu0
        %v926 = vadd.f32 %v903, %v925
        %927 = vdwg.mxu0
        %v928 = vld [vmem:[%s8] sm:$0x1]
        %v930 = vperm.slane %v928, 0
        %v932 = vadd.f32 %v926, %v930
        %v933 = vxor.u32 %v932, 2147483648
        %v934 = vmul.f32 %v933, 1.442695
        %v935 = vpow.pop %v934
        %v936 = vadd.f32 %v935, 1.0
        %v937 = vrcp.pop %v936
        %v938 = vmul.f32 %v936, %v937
        %v939 = vsub.f32 1.0, %v938
        %v940 = vmul.f32 %v937, %v939
        %v941 = vadd.f32 %v937, %v940
        %vm942 = vweird.f32 %v936
        %vm943 = vweird.f32 %v937
        %vm944 = vmor %vm942, %vm943
        %v945 = vsel %vm944, %v937, %v941
        %v946 = vand.u32 2147483647, %v936
        %vm947 = vcmp.eq.f32.partialorder %v946, 8.507059e+37
        %v948 = vand.u32 %v936, 2147483648
        %v949 = vor.u32 1.1754944e-38, %v948
        %v950 = vsel %vm947, %v949, %v945
        %v951 = vmul.f32 1.0, %v950
        %s952 = scalar_lea.vmem %s6, 32
        %v953 = vld [vmem:[%s952] sm:$0xff]
        %v954 = vld [vmem:[%s952 + $0x8] sm:$0xff]
        %v955 = vld [vmem:[%s952 + $0x10] sm:$0xff]
        %v956 = vld [vmem:[%s952 + $0x18] sm:$0xff]
        %s957 = scalar_lea.vmem %s7, 32
        %v958 = vld [vmem:[%s957] sm:$0xff]
        %v959 = vld [vmem:[%s957 + $0x8] sm:$0xff]
        %v960 = vld [vmem:[%s957 + $0x10] sm:$0xff]
        %v961 = vld [vmem:[%s957 + $0x18] sm:$0xff]
        %962 = vmatpush.msra.mxu0 0.0
        %963 = vmatpush.msra.mxu0 0.0
        %964 = vmatpush.msra.mxu0 0.0
        %965 = vmatpush.msra.mxu0 0.0
        %966 = vmatpush.msra.mxu0 0.0
        %967 = vmatpush.msra.mxu0 0.0
        %968 = vmatpush.msra.mxu0 0.0
        %969 = vmatpush.msra.mxu0 0.0
        %970 = vmatpush.msra.mxu0 0.0
        %971 = vmatpush.msra.mxu0 0.0
        %972 = vmatpush.msra.mxu0 0.0
        %973 = vmatpush.msra.mxu0 0.0
        %974 = vmatpush.msra.mxu0 %v961
        %975 = vmatpush.msra.mxu0 %v960
        %976 = vmatpush.msra.mxu0 %v959
        %977 = vmatpush.msra.mxu0 %v958
        %978 = vmatmul.f32.gmra.mxu0 %v883
        %v979 = vpop.f32.mrf.mxu0
        %v980 = vadd.f32 0.0, %v979
        %981 = vdwg.mxu0
        %982 = vmatpush.msra.mxu0 0.0
        %983 = vmatpush.msra.mxu0 0.0
        %984 = vmatpush.msra.mxu0 0.0
        %985 = vmatpush.msra.mxu0 0.0
        %986 = vmatpush.msra.mxu0 0.0
        %987 = vmatpush.msra.mxu0 0.0
        %988 = vmatpush.msra.mxu0 0.0
        %989 = vmatpush.msra.mxu0 0.0
        %990 = vmatpush.msra.mxu0 0.0
        %991 = vmatpush.msra.mxu0 0.0
        %992 = vmatpush.msra.mxu0 0.0
        %993 = vmatpush.msra.mxu0 0.0
        %994 = vmatpush.msra.mxu0 %v956
        %995 = vmatpush.msra.mxu0 %v955
        %996 = vmatpush.msra.mxu0 %v954
        %997 = vmatpush.msra.mxu0 %v953
        %998 = vmatmul.f32.gmra.mxu0 %v906
        %v999 = vpop.f32.mrf.mxu0
        %v1000 = vadd.f32 %v980, %v999
        %1001 = vdwg.mxu0
        %s1002 = scalar_lea.vmem %s8, 1
        %v1003 = vld [vmem:[%s1002] sm:$0x1]
        %v1005 = vperm.slane %v1003, 0
        %v1007 = vadd.f32 %v1000, %v1005
        %v1008 = vtanh.pop %v1007
        %s1009 = scalar_lea.vmem %s6, 64
        %v1010 = vld [vmem:[%s1009] sm:$0xff]
        %v1011 = vld [vmem:[%s1009 + $0x8] sm:$0xff]
        %v1012 = vld [vmem:[%s1009 + $0x10] sm:$0xff]
        %v1013 = vld [vmem:[%s1009 + $0x18] sm:$0xff]
        %s1014 = scalar_lea.vmem %s7, 64
        %v1015 = vld [vmem:[%s1014] sm:$0xff]
        %v1016 = vld [vmem:[%s1014 + $0x8] sm:$0xff]
        %v1017 = vld [vmem:[%s1014 + $0x10] sm:$0xff]
        %v1018 = vld [vmem:[%s1014 + $0x18] sm:$0xff]
        %1019 = vmatpush.msra.mxu0 0.0
        %1020 = vmatpush.msra.mxu0 0.0
        %1021 = vmatpush.msra.mxu0 0.0
        %1022 = vmatpush.msra.mxu0 0.0
        %1023 = vmatpush.msra.mxu0 0.0
        %1024 = vmatpush.msra.mxu0 0.0
        %1025 = vmatpush.msra.mxu0 0.0
        %1026 = vmatpush.msra.mxu0 0.0
        %1027 = vmatpush.msra.mxu0 0.0
        %1028 = vmatpush.msra.mxu0 0.0
        %1029 = vmatpush.msra.mxu0 0.0
        %1030 = vmatpush.msra.mxu0 0.0
        %1031 = vmatpush.msra.mxu0 %v1018
        %1032 = vmatpush.msra.mxu0 %v1017
        %1033 = vmatpush.msra.mxu0 %v1016
        %1034 = vmatpush.msra.mxu0 %v1015
        %1035 = vmatmul.f32.gmra.mxu0 %v883
        %v1036 = vpop.f32.mrf.mxu0
        %v1037 = vadd.f32 0.0, %v1036
        %1038 = vdwg.mxu0
        %1039 = vmatpush.msra.mxu0 0.0
        %1040 = vmatpush.msra.mxu0 0.0
        %1041 = vmatpush.msra.mxu0 0.0
        %1042 = vmatpush.msra.mxu0 0.0
        %1043 = vmatpush.msra.mxu0 0.0
        %1044 = vmatpush.msra.mxu0 0.0
        %1045 = vmatpush.msra.mxu0 0.0
        %1046 = vmatpush.msra.mxu0 0.0
        %1047 = vmatpush.msra.mxu0 0.0
        %1048 = vmatpush.msra.mxu0 0.0
        %1049 = vmatpush.msra.mxu0 0.0
        %1050 = vmatpush.msra.mxu0 0.0
        %1051 = vmatpush.msra.mxu0 %v1013
        %1052 = vmatpush.msra.mxu0 %v1012
        %1053 = vmatpush.msra.mxu0 %v1011
        %1054 = vmatpush.msra.mxu0 %v1010
        %1055 = vmatmul.f32.gmra.mxu0 %v906
        %v1056 = vpop.f32.mrf.mxu0
        %v1057 = vadd.f32 %v1037, %v1056
        %1058 = vdwg.mxu0
        %s1059 = scalar_lea.vmem %s8, 2
        %v1060 = vld [vmem:[%s1059] sm:$0x1]
        %v1062 = vperm.slane %v1060, 0
        %v1064 = vadd.f32 %v1057, %v1062
        %v1065 = vxor.u32 %v1064, 2147483648
        %v1066 = vmul.f32 %v1065, 1.442695
        %v1067 = vpow.pop %v1066
        %v1068 = vadd.f32 %v1067, 1.0
        %v1069 = vrcp.pop %v1068
        %v1070 = vmul.f32 %v1068, %v1069
        %v1071 = vsub.f32 1.0, %v1070
        %v1072 = vmul.f32 %v1069, %v1071
        %v1073 = vadd.f32 %v1069, %v1072
        %vm1074 = vweird.f32 %v1068
        %vm1075 = vweird.f32 %v1069
        %vm1076 = vmor %vm1074, %vm1075
        %v1077 = vsel %vm1076, %v1069, %v1073
        %v1078 = vand.u32 2147483647, %v1068
        %vm1079 = vcmp.eq.f32.partialorder %v1078, 8.507059e+37
        %v1080 = vand.u32 %v1068, 2147483648
        %v1081 = vor.u32 1.1754944e-38, %v1080
        %v1082 = vsel %vm1079, %v1081, %v1077
        %v1083 = vmul.f32 1.0, %v1082
        %v1084 = vmul.f32 %v951, %v1008
        %v1085 = vtanh.pop %v1084
        %v1086 = vmul.f32 %v1083, %v1085
        %s1087 = scalar_lea.vmem %s6, 96
        %v1088 = vld [vmem:[%s1087] sm:$0xff]
        %v1089 = vld [vmem:[%s1087 + $0x8] sm:$0xff]
        %v1090 = vld [vmem:[%s1087 + $0x10] sm:$0xff]
        %v1091 = vld [vmem:[%s1087 + $0x18] sm:$0xff]
        %s1092 = scalar_lea.vmem %s7, 96
        %v1093 = vld [vmem:[%s1092] sm:$0xff]
        %v1094 = vld [vmem:[%s1092 + $0x8] sm:$0xff]
        %v1095 = vld [vmem:[%s1092 + $0x10] sm:$0xff]
        %v1096 = vld [vmem:[%s1092 + $0x18] sm:$0xff]
        %1097 = vmatpush.msra.mxu0 0.0
        %1098 = vmatpush.msra.mxu0 0.0
        %1099 = vmatpush.msra.mxu0 0.0
        %1100 = vmatpush.msra.mxu0 0.0
        %1101 = vmatpush.msra.mxu0 0.0
        %1102 = vmatpush.msra.mxu0 0.0
        %1103 = vmatpush.msra.mxu0 0.0
        %1104 = vmatpush.msra.mxu0 0.0
        %1105 = vmatpush.msra.mxu0 0.0
        %1106 = vmatpush.msra.mxu0 0.0
        %1107 = vmatpush.msra.mxu0 0.0
        %1108 = vmatpush.msra.mxu0 0.0
        %1109 = vmatpush.msra.mxu0 %v1096
        %1110 = vmatpush.msra.mxu0 %v1095
        %1111 = vmatpush.msra.mxu0 %v1094
        %1112 = vmatpush.msra.mxu0 %v1093
        %1113 = vmatmul.f32.gmra.mxu0 %v883
        %v1114 = vpop.f32.mrf.mxu0
        %v1115 = vadd.f32 0.0, %v1114
        %1116 = vdwg.mxu0
        %1117 = vmatpush.msra.mxu0 0.0
        %1118 = vmatpush.msra.mxu0 0.0
        %1119 = vmatpush.msra.mxu0 0.0
        %1120 = vmatpush.msra.mxu0 0.0
        %1121 = vmatpush.msra.mxu0 0.0
        %1122 = vmatpush.msra.mxu0 0.0
        %1123 = vmatpush.msra.mxu0 0.0
        %1124 = vmatpush.msra.mxu0 0.0
        %1125 = vmatpush.msra.mxu0 0.0
        %1126 = vmatpush.msra.mxu0 0.0
        %1127 = vmatpush.msra.mxu0 0.0
        %1128 = vmatpush.msra.mxu0 0.0
        %1129 = vmatpush.msra.mxu0 %v1091
        %1130 = vmatpush.msra.mxu0 %v1090
        %1131 = vmatpush.msra.mxu0 %v1089
        %1132 = vmatpush.msra.mxu0 %v1088
        %1133 = vmatmul.f32.gmra.mxu0 %v906
        %v1134 = vpop.f32.mrf.mxu0
        %v1135 = vadd.f32 %v1115, %v1134
        %1136 = vdwg.mxu0
        %s1137 = scalar_lea.vmem %s8, 3
        %v1138 = vld [vmem:[%s1137] sm:$0x1]
        %v1140 = vperm.slane %v1138, 0
        %v1142 = vadd.f32 %v1135, %v1140
        %v1143 = vxor.u32 %v1142, 2147483648
        %v1144 = vmul.f32 %v1143, 1.442695
        %v1145 = vpow.pop %v1144
        %v1146 = vadd.f32 %v1145, 1.0
        %v1147 = vrcp.pop %v1146
        %v1148 = vmul.f32 %v1146, %v1147
        %v1149 = vsub.f32 1.0, %v1148
        %v1150 = vmul.f32 %v1147, %v1149
        %v1151 = vadd.f32 %v1147, %v1150
        %vm1152 = vweird.f32 %v1146
        %vm1153 = vweird.f32 %v1147
        %vm1154 = vmor %vm1152, %vm1153
        %v1155 = vsel %vm1154, %v1147, %v1151
        %v1156 = vand.u32 2147483647, %v1146
        %vm1157 = vcmp.eq.f32.partialorder %v1156, 8.507059e+37
        %v1158 = vand.u32 %v1146, 2147483648
        %v1159 = vor.u32 1.1754944e-38, %v1158
        %v1160 = vsel %vm1157, %v1159, %v1155
        %v1161 = vmul.f32 1.0, %v1160
        %s1162 = scalar_lea.vmem %s6, 128
        %v1163 = vld [vmem:[%s1162] sm:$0xff]
        %v1164 = vld [vmem:[%s1162 + $0x8] sm:$0xff]
        %v1165 = vld [vmem:[%s1162 + $0x10] sm:$0xff]
        %v1166 = vld [vmem:[%s1162 + $0x18] sm:$0xff]
        %s1167 = scalar_lea.vmem %s7, 128
        %v1168 = vld [vmem:[%s1167] sm:$0xff]
        %v1169 = vld [vmem:[%s1167 + $0x8] sm:$0xff]
        %v1170 = vld [vmem:[%s1167 + $0x10] sm:$0xff]
        %v1171 = vld [vmem:[%s1167 + $0x18] sm:$0xff]
        %1172 = vmatpush.msra.mxu0 0.0
        %1173 = vmatpush.msra.mxu0 0.0
        %1174 = vmatpush.msra.mxu0 0.0
        %1175 = vmatpush.msra.mxu0 0.0
        %1176 = vmatpush.msra.mxu0 0.0
        %1177 = vmatpush.msra.mxu0 0.0
        %1178 = vmatpush.msra.mxu0 0.0
        %1179 = vmatpush.msra.mxu0 0.0
        %1180 = vmatpush.msra.mxu0 0.0
        %1181 = vmatpush.msra.mxu0 0.0
        %1182 = vmatpush.msra.mxu0 0.0
        %1183 = vmatpush.msra.mxu0 0.0
        %1184 = vmatpush.msra.mxu0 %v1171
        %1185 = vmatpush.msra.mxu0 %v1170
        %1186 = vmatpush.msra.mxu0 %v1169
        %1187 = vmatpush.msra.mxu0 %v1168
        %1188 = vmatmul.f32.gmra.mxu0 %v883
        %v1189 = vpop.f32.mrf.mxu0
        %v1190 = vadd.f32 0.0, %v1189
        %1191 = vdwg.mxu0
        %1192 = vmatpush.msra.mxu0 0.0
        %1193 = vmatpush.msra.mxu0 0.0
        %1194 = vmatpush.msra.mxu0 0.0
        %1195 = vmatpush.msra.mxu0 0.0
        %1196 = vmatpush.msra.mxu0 0.0
        %1197 = vmatpush.msra.mxu0 0.0
        %1198 = vmatpush.msra.mxu0 0.0
        %1199 = vmatpush.msra.mxu0 0.0
        %1200 = vmatpush.msra.mxu0 0.0
        %1201 = vmatpush.msra.mxu0 0.0
        %1202 = vmatpush.msra.mxu0 0.0
        %1203 = vmatpush.msra.mxu0 0.0
        %1204 = vmatpush.msra.mxu0 %v1166
        %1205 = vmatpush.msra.mxu0 %v1165
        %1206 = vmatpush.msra.mxu0 %v1164
        %1207 = vmatpush.msra.mxu0 %v1163
        %1208 = vmatmul.f32.gmra.mxu0 %v906
        %v1209 = vpop.f32.mrf.mxu0
        %v1210 = vadd.f32 %v1190, %v1209
        %1211 = vdwg.mxu0
        %s1212 = scalar_lea.vmem %s8, 4
        %v1213 = vld [vmem:[%s1212] sm:$0x1]
        %v1215 = vperm.slane %v1213, 0
        %v1217 = vadd.f32 %v1210, %v1215
        %v1218 = vtanh.pop %v1217
        %s1219 = scalar_lea.vmem %s6, 160
        %v1220 = vld [vmem:[%s1219] sm:$0xff]
        %v1221 = vld [vmem:[%s1219 + $0x8] sm:$0xff]
        %v1222 = vld [vmem:[%s1219 + $0x10] sm:$0xff]
        %v1223 = vld [vmem:[%s1219 + $0x18] sm:$0xff]
        %s1224 = scalar_lea.vmem %s7, 160
        %v1225 = vld [vmem:[%s1224] sm:$0xff]
        %v1226 = vld [vmem:[%s1224 + $0x8] sm:$0xff]
        %v1227 = vld [vmem:[%s1224 + $0x10] sm:$0xff]
        %v1228 = vld [vmem:[%s1224 + $0x18] sm:$0xff]
        %1229 = vmatpush.msra.mxu0 0.0
        %1230 = vmatpush.msra.mxu0 0.0
        %1231 = vmatpush.msra.mxu0 0.0
        %1232 = vmatpush.msra.mxu0 0.0
        %1233 = vmatpush.msra.mxu0 0.0
        %1234 = vmatpush.msra.mxu0 0.0
        %1235 = vmatpush.msra.mxu0 0.0
        %1236 = vmatpush.msra.mxu0 0.0
        %1237 = vmatpush.msra.mxu0 0.0
        %1238 = vmatpush.msra.mxu0 0.0
        %1239 = vmatpush.msra.mxu0 0.0
        %1240 = vmatpush.msra.mxu0 0.0
        %1241 = vmatpush.msra.mxu0 %v1228
        %1242 = vmatpush.msra.mxu0 %v1227
        %1243 = vmatpush.msra.mxu0 %v1226
        %1244 = vmatpush.msra.mxu0 %v1225
        %1245 = vmatmul.f32.gmra.mxu0 %v883
        %v1246 = vpop.f32.mrf.mxu0
        %v1247 = vadd.f32 0.0, %v1246
        %1248 = vdwg.mxu0
        %1249 = vmatpush.msra.mxu0 0.0
        %1250 = vmatpush.msra.mxu0 0.0
        %1251 = vmatpush.msra.mxu0 0.0
        %1252 = vmatpush.msra.mxu0 0.0
        %1253 = vmatpush.msra.mxu0 0.0
        %1254 = vmatpush.msra.mxu0 0.0
        %1255 = vmatpush.msra.mxu0 0.0
        %1256 = vmatpush.msra.mxu0 0.0
        %1257 = vmatpush.msra.mxu0 0.0
        %1258 = vmatpush.msra.mxu0 0.0
        %1259 = vmatpush.msra.mxu0 0.0
        %1260 = vmatpush.msra.mxu0 0.0
        %1261 = vmatpush.msra.mxu0 %v1223
        %1262 = vmatpush.msra.mxu0 %v1222
        %1263 = vmatpush.msra.mxu0 %v1221
        %1264 = vmatpush.msra.mxu0 %v1220
        %1265 = vmatmul.f32.gmra.mxu0 %v906
        %v1266 = vpop.f32.mrf.mxu0
        %v1267 = vadd.f32 %v1247, %v1266
        %1268 = vdwg.mxu0
        %s1269 = scalar_lea.vmem %s8, 5
        %v1270 = vld [vmem:[%s1269] sm:$0x1]
        %v1272 = vperm.slane %v1270, 0
        %v1274 = vadd.f32 %v1267, %v1272
        %v1275 = vxor.u32 %v1274, 2147483648
        %v1276 = vmul.f32 %v1275, 1.442695
        %v1277 = vpow.pop %v1276
        %v1278 = vadd.f32 %v1277, 1.0
        %v1279 = vrcp.pop %v1278
        %v1280 = vmul.f32 %v1278, %v1279
        %v1281 = vsub.f32 1.0, %v1280
        %v1282 = vmul.f32 %v1279, %v1281
        %v1283 = vadd.f32 %v1279, %v1282
        %vm1284 = vweird.f32 %v1278
        %vm1285 = vweird.f32 %v1279
        %vm1286 = vmor %vm1284, %vm1285
        %v1287 = vsel %vm1286, %v1279, %v1283
        %v1288 = vand.u32 2147483647, %v1278
        %vm1289 = vcmp.eq.f32.partialorder %v1288, 8.507059e+37
        %v1290 = vand.u32 %v1278, 2147483648
        %v1291 = vor.u32 1.1754944e-38, %v1290
        %v1292 = vsel %vm1289, %v1291, %v1287
        %v1293 = vmul.f32 1.0, %v1292
        %v1294 = vmul.f32 %v1161, %v1218
        %v1295 = vtanh.pop %v1294
        %v1296 = vmul.f32 %v1293, %v1295
        %v1297 = vld [vmem:[%s9] sm:$0xff]
        %v1298 = vld [vmem:[%s9 + $0x8] sm:$0xff]
        %v1299 = vld [vmem:[%s9 + $0x10] sm:$0xff]
        %v1300 = vld [vmem:[%s9 + $0x18] sm:$0xff]
        %v1301 = vld [vmem:[%s10] sm:$0xff]
        %v1302 = vld [vmem:[%s10 + $0x8] sm:$0xff]
        %v1303 = vld [vmem:[%s10 + $0x10] sm:$0xff]
        %v1304 = vld [vmem:[%s10 + $0x18] sm:$0xff]
        %v1306 = vsel %vm448, %v1296, 0
        %1308 = vmatpush.msra.mxu0 0.0
        %1309 = vmatpush.msra.mxu0 0.0
        %1310 = vmatpush.msra.mxu0 0.0
        %1311 = vmatpush.msra.mxu0 0.0
        %1312 = vmatpush.msra.mxu0 0.0
        %1313 = vmatpush.msra.mxu0 0.0
        %1314 = vmatpush.msra.mxu0 0.0
        %1315 = vmatpush.msra.mxu0 0.0
        %1316 = vmatpush.msra.mxu0 0.0
        %1317 = vmatpush.msra.mxu0 0.0
        %1318 = vmatpush.msra.mxu0 0.0
        %1319 = vmatpush.msra.mxu0 0.0
        %1320 = vmatpush.msra.mxu0 %v1304
        %1321 = vmatpush.msra.mxu0 %v1303
        %1322 = vmatpush.msra.mxu0 %v1302
        %1323 = vmatpush.msra.mxu0 %v1301
        %1324 = vmatmul.f32.gmra.mxu0 %v1306
        %v1325 = vpop.f32.mrf.mxu0
        %v1326 = vadd.f32 0.0, %v1325
        %1327 = vdwg.mxu0
        %v1329 = vsel %vm448, %v1086, 0
        %1331 = vmatpush.msra.mxu0 0.0
        %1332 = vmatpush.msra.mxu0 0.0
        %1333 = vmatpush.msra.mxu0 0.0
        %1334 = vmatpush.msra.mxu0 0.0
        %1335 = vmatpush.msra.mxu0 0.0
        %1336 = vmatpush.msra.mxu0 0.0
        %1337 = vmatpush.msra.mxu0 0.0
        %1338 = vmatpush.msra.mxu0 0.0
        %1339 = vmatpush.msra.mxu0 0.0
        %1340 = vmatpush.msra.mxu0 0.0
        %1341 = vmatpush.msra.mxu0 0.0
        %1342 = vmatpush.msra.mxu0 0.0
        %1343 = vmatpush.msra.mxu0 %v1300
        %1344 = vmatpush.msra.mxu0 %v1299
        %1345 = vmatpush.msra.mxu0 %v1298
        %1346 = vmatpush.msra.mxu0 %v1297
        %1347 = vmatmul.f32.gmra.mxu0 %v1329
        %v1348 = vpop.f32.mrf.mxu0
        %v1349 = vadd.f32 %v1326, %v1348
        %1350 = vdwg.mxu0
        %v1351 = vld [vmem:[#allocation4] sm:$0x1]
        %v1353 = vperm.slane %v1351, 0
        %v1355 = vadd.f32 %v1349, %v1353
        %vm1356 = vcmask 1024
        %1357 = vst.msk [vmem:[%s433] sm:$0x3] %vm1356, %v1355
      $region76: #{lstm_model_forward.1} parent=67 // pred_fallthru
        _
      %p1358 = scmp.lt.s32.totalorder %s29, 0
      %s1359 = scalar_select %p1358, %s29, 0
      %s1360 = smul.addr %s1359, 2
      %s1361 = scalar_lea.vmem %s12, %s1360
      // Predicated region
      $region77: #{lstm_model_forward.1} parent=67 // pred_check
        %p1362 = pneg %p314
      $region78: #{lstm_model_forward.1} parent=67 // pred_check_branch
        %1364 = sbr.rel (%p1362) target = $region80
      $region79: #{lstm_model_forward.1} parent=67 // pred_region
        _
      $region80: #{lstm_model_forward.1} parent=67 // pred_fallthru
        _
      // Predicated region
      $region81: #{lstm_model_forward.1} parent=67 // pred_check
        %p1365 = pneg %p314
      $region82: #{lstm_model_forward.1} parent=67 // pred_check_branch
        %1367 = sbr.rel (%p1365) target = $region84
      $region83: #{lstm_model_forward.1} parent=67 // pred_region
        %p1368 = scmp.lt.s32.totalorder %s29, 0
        %s1369 = scalar_select %p1368, %s29, 0
        %s1370 = smul.addr %s1369, 2
        %s1371 = scalar_lea.vmem %s12, %s1370
      $region84: #{lstm_model_forward.1} parent=67 // pred_fallthru
        _
    $region68: #{lstm_model_forward.1} parent=5 // pred_fallthru
      _
    %p1372 = scmp.le.s32.totalorder 2, %s20
    // Predicated region
    $region85: #{lstm_model_forward.1} parent=5 // pred_check
      %p1373 = pneg %p1372
    $region86: #{lstm_model_forward.1} parent=5 // pred_check_branch
      %1375 = sbr.rel (%p1373) target = $region88
    $region87: #{lstm_model_forward.1} parent=5 // pred_region
      %s1376 = ssub.s32 %s20, 2
    $region88: #{lstm_model_forward.1} parent=5 // pred_fallthru
      _
  $region6: #{lstm_model_forward.1} parent=0 // loop_footer
    %s24 = sadd.s32 1, %s20
  $region7: #{lstm_model_forward.1} parent=0 // loop_footer_branch
    %19 = sbr.rel target = $region3
  $region8: #{lstm_model_forward.1} parent=0 // loop_exit
    _

</llo_original>
